<compile_context>
chip_gen: v5e
topology: v5e:2x2
jax: 0.10.0
libtpu: 0.0.40
codegen_flags: <defaults>
</compile_context>

<pallas_src>
import jax
import jax.numpy as jnp
from jax.experimental import pallas as pl
from jax.experimental.pallas import tpu as pltpu

# ---------------------------------------------------------------------------
# Problem sizes (consistent with the module: width * height * 3 -> 512 -> 512 -> C)
# ---------------------------------------------------------------------------
BATCH = 2
CHANNELS = 3
HEIGHT = 16
WIDTH = 16
IN_FEATURES = CHANNELS * HEIGHT * WIDTH   # 768  (= 6 * 128, lane-aligned)
HIDDEN = 512
NUM_CATEGORIES = 10

N_PAD = 128        # lane-dense logits width (wrapper slices [:, :10] back off)
MAX_TILE_M = 256   # rows per grid step once the batch grows (128-aligned, VMEM-safe)


# ---------------------------------------------------------------------------
# Pallas kernel: fused 3-layer MLP (bf16 MXU operands, f32 accumulation/epilogue)
# ---------------------------------------------------------------------------
def mlp_kernel(x_ref, w1_ref, w2_ref, w3_ref, b_ref, o_ref):
    # x_ref:  (TILE_M, IN_FEATURES) f32  (cast to bf16 in-kernel)
    # w1_ref: (IN_FEATURES, HIDDEN) bf16
    # w2_ref: (HIDDEN, HIDDEN)      bf16
    # w3_ref: (HIDDEN, N_PAD)       bf16
    # b_ref:  (3, HIDDEN)           f32  -- row0=b1, row1=b2, row2=[b3 | zeros]
    # o_ref:  (TILE_M, N_PAD)       f32
    x = x_ref[...].astype(jnp.bfloat16)

    b1 = b_ref[0:1, :]
    b2 = b_ref[1:2, :]
    b3 = b_ref[2:3, :N_PAD]

    h1 = jnp.dot(x, w1_ref[...], preferred_element_type=jnp.float32)
    h1 = jnp.maximum(h1 + b1, 0.0)                                   # bias + ReLU fused

    h2 = jnp.dot(h1.astype(jnp.bfloat16), w2_ref[...],
                 preferred_element_type=jnp.float32)
    h2 = jnp.maximum(h2 + b2, 0.0)                                   # bias + ReLU fused

    logits = jnp.dot(h2.astype(jnp.bfloat16), w3_ref[...],
                     preferred_element_type=jnp.float32)
    o_ref[...] = (logits + b3).astype(o_ref.dtype)                   # lane-dense store


# ---------------------------------------------------------------------------
# Wrapper: flatten NCHW like nn.Flatten, pad M, tile M over a grid, slice back.
# jit so reshape / pad / slice fuse around the pallas_call.
# ---------------------------------------------------------------------------
def _padded_m_and_tile(batch):
    m16 = ((batch + 15) // 16) * 16          # bf16 sublane multiple
    if m16 <= MAX_TILE_M:
        return m16, m16                      # single tile
    tile = MAX_TILE_M
    return ((batch + tile - 1) // tile) * tile, tile


@jax.jit
def conv_neural_network_forward(x_nchw, params):
    """Forward pass matching ConvNeuralNetwork.forward.

    x_nchw: (B, C, H, W) float32
    params: dict with kernel-ready weights (bf16, w3 N-padded) and packed f32 biases
    returns logits: (B, NUM_CATEGORIES) float32
    """
    b = x_nchw.shape[0]
    m_pad, tile_m = _padded_m_and_tile(b)

    # nn.Flatten(): row-major flatten of (C, H, W) per example; zero-pad M rows.
    x_flat = x_nchw.reshape(b, IN_FEATURES)
    x_pad = jnp.pad(x_flat, ((0, m_pad - b), (0, 0)))

    flops = 2 * m_pad * (IN_FEATURES * HIDDEN + HIDDEN * HIDDEN + HIDDEN * N_PAD)
    bytes_accessed = (
        x_pad.size * 4
        + params["w1"].size * 2 + params["w2"].size * 2 + params["w3"].size * 2
        + params["b"].size * 4
        + m_pad * N_PAD * 4
    )

    out = pl.pallas_call(
        mlp_kernel,
        out_shape=jax.ShapeDtypeStruct((m_pad, N_PAD), jnp.float32),
        grid_spec=pltpu.PrefetchScalarGridSpec(
            num_scalar_prefetch=0,
            grid=(m_pad // tile_m,),
            in_specs=[
                pl.BlockSpec((tile_m, IN_FEATURES), lambda i: (i, 0)),   # x tiles over M
                pl.BlockSpec((IN_FEATURES, HIDDEN), lambda i: (0, 0)),   # weights resident
                pl.BlockSpec((HIDDEN, HIDDEN), lambda i: (0, 0)),
                pl.BlockSpec((HIDDEN, N_PAD), lambda i: (0, 0)),
                pl.BlockSpec((3, HIDDEN), lambda i: (0, 0)),             # packed biases
            ],
            out_specs=pl.BlockSpec((tile_m, N_PAD), lambda i: (i, 0)),
        ),
        compiler_params=pltpu.CompilerParams(
            dimension_semantics=("parallel",)),                          # v7x: 2 TCs split M
        cost_estimate=pl.CostEstimate(
            flops=flops, transcendentals=0, bytes_accessed=bytes_accessed),
    )(x_pad, params["w1"], params["w2"], params["w3"], params["b"])

    # Strip the M / N padding before returning.
    return out[:b, :NUM_CATEGORIES]


# ---------------------------------------------------------------------------
# Parameter init (PyTorch-like fan-in uniform) + kernel-ready packing
# ---------------------------------------------------------------------------
def init_params_f32(key):
    k1, k2, k3, k4, k5, k6 = jax.random.split(key, 6)

    def linear_init(kw, kb, fan_in, fan_out):
        bound = 1.0 / jnp.sqrt(fan_in)
        w = jax.random.uniform(kw, (fan_in, fan_out), jnp.float32, -bound, bound)
        b = jax.random.uniform(kb, (1, fan_out), jnp.float32, -bound, bound)
        return w, b

    w1, b1 = linear_init(k1, k2, IN_FEATURES, HIDDEN)
    w2, b2 = linear_init(k3, k4, HIDDEN, HIDDEN)
    w3, b3 = linear_init(k5, k6, HIDDEN, NUM_CATEGORIES)
    return {"w1": w1, "b1": b1, "w2": w2, "b2": b2, "w3": w3, "b3": b3}


def prepare_kernel_params(p):
    """One-time packing (amortized across calls): weights -> bf16, final-layer N dim
    padded to 128, all three biases packed into a single (3, 512) f32 buffer.
    TODO(synk): optional int8 (v5e/v6e) or fp8 (v7x) weight compression for w1/w2."""
    w3_pad = jnp.zeros((HIDDEN, N_PAD), jnp.bfloat16).at[:, :NUM_CATEGORIES].set(
        p["w3"].astype(jnp.bfloat16))
    b_packed = jnp.zeros((3, HIDDEN), jnp.float32)
    b_packed = b_packed.at[0, :].set(p["b1"][0])
    b_packed = b_packed.at[1, :].set(p["b2"][0])
    b_packed = b_packed.at[2, :NUM_CATEGORIES].set(p["b3"][0])
    return {
        "w1": p["w1"].astype(jnp.bfloat16),
        "w2": p["w2"].astype(jnp.bfloat16),
        "w3": w3_pad,
        "b": b_packed,
    }


if __name__ == "__main__":
    key = jax.random.PRNGKey(0)
    kx, kp = jax.random.split(key)

    # Example input batch in NCHW, like the PyTorch DataLoader would produce.
    x = jax.random.normal(kx, (BATCH, CHANNELS, HEIGHT, WIDTH), jnp.float32)
    params_f32 = init_params_f32(kp)
    params_kernel = prepare_kernel_params(params_f32)

    logits = conv_neural_network_forward(x, params_kernel)
    logits = jax.block_until_ready(logits)

    # Reference check against plain f32 JAX (same math as the PyTorch forward).
    # bf16 matmul operands with f32 accumulation -> loosened tolerance.
    xf = x.reshape(BATCH, -1)
    h1 = jnp.maximum(xf @ params_f32["w1"] + params_f32["b1"], 0.0)
    h2 = jnp.maximum(h1 @ params_f32["w2"] + params_f32["b2"], 0.0)
    ref = h2 @ params_f32["w3"] + params_f32["b3"]

    assert logits.shape == (BATCH, NUM_CATEGORIES)
    assert jnp.allclose(logits, ref, atol=5e-2, rtol=5e-2), (
        float(jnp.max(jnp.abs(logits - ref))))

    print("KERNEL_OK")
</pallas_src>

<mosaic_0001>
module attributes {stable_mosaic.version = 11 : i64} {
  func.func @mlp_kernel(%arg0: i32, %arg1: memref<16x768xf32, #tpu.memory_space<vmem>>, %arg2: memref<768x512xbf16, #tpu.memory_space<vmem>>, %arg3: memref<512x512xbf16, #tpu.memory_space<vmem>>, %arg4: memref<512x128xbf16, #tpu.memory_space<vmem>>, %arg5: memref<3x512xf32, #tpu.memory_space<vmem>>, %arg6: memref<16x128xf32, #tpu.memory_space<vmem>>) attributes {dimension_semantics = [#tpu.dimension_semantics<parallel>], iteration_bounds = array<i64: 1>, scalar_prefetch = 0 : i64, scratch_operands = 0 : i64, tpu.core_type = #tpu.core_type<tc>, window_params = [{transform_indices = @transform_0, window_bounds = array<i64: 16, 768>}, {pipeline_mode = #tpu.pipeline_mode<synchronous>, transform_indices = @transform_1, window_bounds = array<i64: 768, 512>}, {pipeline_mode = #tpu.pipeline_mode<synchronous>, transform_indices = @transform_2, window_bounds = array<i64: 512, 512>}, {pipeline_mode = #tpu.pipeline_mode<synchronous>, transform_indices = @transform_3, window_bounds = array<i64: 512, 128>}, {pipeline_mode = #tpu.pipeline_mode<synchronous>, transform_indices = @transform_4, window_bounds = array<i64: 3, 512>}, {transform_indices = @transform_5, window_bounds = array<i64: 16, 128>}]} {
    %c0 = arith.constant 0 : index
    %c0_0 = arith.constant 0 : index
    %0 = vector.load %arg1[%c0, %c0_0] : memref<16x768xf32, #tpu.memory_space<vmem>>, vector<16x768xf32>
    %1 = arith.truncf %0 : vector<16x768xf32> to vector<16x768xbf16>
    %c0_1 = arith.constant 0 : index
    %c0_2 = arith.constant 0 : index
    %2 = vector.load %arg5[%c0_1, %c0_2] : memref<3x512xf32, #tpu.memory_space<vmem>>, vector<1x512xf32>
    %c1 = arith.constant 1 : index
    %c0_3 = arith.constant 0 : index
    %3 = vector.load %arg5[%c1, %c0_3] : memref<3x512xf32, #tpu.memory_space<vmem>>, vector<1x512xf32>
    %c2 = arith.constant 2 : index
    %c0_4 = arith.constant 0 : index
    %4 = vector.load %arg5[%c2, %c0_4] : memref<3x512xf32, #tpu.memory_space<vmem>>, vector<1x128xf32>
    %c0_5 = arith.constant 0 : index
    %c0_6 = arith.constant 0 : index
    %5 = vector.load %arg2[%c0_5, %c0_6] : memref<768x512xbf16, #tpu.memory_space<vmem>>, vector<768x512xbf16>
    %cst = arith.constant dense<0.000000e+00> : vector<16x512xf32>
    %6 = tpu.matmul %1, %5, %cst {dimension_numbers = #tpu.dot_dimension_numbers<[1], [0], [0], [1], [0, 0, 1, 1], [], []>} : vector<16x768xbf16>, vector<768x512xbf16>, vector<16x512xf32> -> vector<16x512xf32>
    %7 = vector.broadcast %2 : vector<1x512xf32> to vector<16x512xf32>
    %8 = arith.addf %6, %7 : vector<16x512xf32>
    %cst_7 = arith.constant 0.000000e+00 : f32
    %9 = vector.broadcast %cst_7 : f32 to vector<16x512xf32>
    %10 = arith.maximumf %8, %9 : vector<16x512xf32>
    %11 = arith.truncf %10 : vector<16x512xf32> to vector<16x512xbf16>
    %c0_8 = arith.constant 0 : index
    %c0_9 = arith.constant 0 : index
    %12 = vector.load %arg3[%c0_8, %c0_9] : memref<512x512xbf16, #tpu.memory_space<vmem>>, vector<512x512xbf16>
    %cst_10 = arith.constant dense<0.000000e+00> : vector<16x512xf32>
    %13 = tpu.matmul %11, %12, %cst_10 {dimension_numbers = #tpu.dot_dimension_numbers<[1], [0], [0], [1], [0, 0, 1, 1], [], []>} : vector<16x512xbf16>, vector<512x512xbf16>, vector<16x512xf32> -> vector<16x512xf32>
    %14 = vector.broadcast %3 : vector<1x512xf32> to vector<16x512xf32>
    %15 = arith.addf %13, %14 : vector<16x512xf32>
    %cst_11 = arith.constant 0.000000e+00 : f32
    %16 = vector.broadcast %cst_11 : f32 to vector<16x512xf32>
    %17 = arith.maximumf %15, %16 : vector<16x512xf32>
    %18 = arith.truncf %17 : vector<16x512xf32> to vector<16x512xbf16>
    %c0_12 = arith.constant 0 : index
    %c0_13 = arith.constant 0 : index
    %19 = vector.load %arg4[%c0_12, %c0_13] : memref<512x128xbf16, #tpu.memory_space<vmem>>, vector<512x128xbf16>
    %cst_14 = arith.constant dense<0.000000e+00> : vector<16x128xf32>
    %20 = tpu.matmul %18, %19, %cst_14 {dimension_numbers = #tpu.dot_dimension_numbers<[1], [0], [0], [1], [0, 0, 1, 1], [], []>} : vector<16x512xbf16>, vector<512x128xbf16>, vector<16x128xf32> -> vector<16x128xf32>
    %21 = vector.broadcast %4 : vector<1x128xf32> to vector<16x128xf32>
    %22 = arith.addf %20, %21 : vector<16x128xf32>
    %c0_15 = arith.constant 0 : index
    %c0_16 = arith.constant 0 : index
    %23 = vector.load %arg6[%c0_15, %c0_16] : memref<16x128xf32, #tpu.memory_space<vmem>>, vector<16x128xf32>
    tpu.vector_store %arg6[%c0_15, %c0_16], %22 {strides = array<i32>} : memref<16x128xf32, #tpu.memory_space<vmem>>, vector<16x128xf32>,
    return
  }
  func.func @transform_0(%arg0: i32) -> (i32, i32) {
    %c0_i32 = arith.constant 0 : i32
    %c0_i32_0 = arith.constant 0 : i32
    return %arg0, %c0_i32 : i32, i32
  }
  func.func @transform_1(%arg0: i32) -> (i32, i32) {
    %c0_i32 = arith.constant 0 : i32
    %c0_i32_0 = arith.constant 0 : i32
    %c0_i32_1 = arith.constant 0 : i32
    return %c0_i32, %c0_i32_0 : i32, i32
  }
  func.func @transform_2(%arg0: i32) -> (i32, i32) {
    %c0_i32 = arith.constant 0 : i32
    %c0_i32_0 = arith.constant 0 : i32
    %c0_i32_1 = arith.constant 0 : i32
    return %c0_i32, %c0_i32_0 : i32, i32
  }
  func.func @transform_3(%arg0: i32) -> (i32, i32) {
    %c0_i32 = arith.constant 0 : i32
    %c0_i32_0 = arith.constant 0 : i32
    %c0_i32_1 = arith.constant 0 : i32
    return %c0_i32, %c0_i32_0 : i32, i32
  }
  func.func @transform_4(%arg0: i32) -> (i32, i32) {
    %c0_i32 = arith.constant 0 : i32
    %c0_i32_0 = arith.constant 0 : i32
    %c0_i32_1 = arith.constant 0 : i32
    return %c0_i32, %c0_i32_0 : i32, i32
  }
  func.func @transform_5(%arg0: i32) -> (i32, i32) {
    %c0_i32 = arith.constant 0 : i32
    %c0_i32_0 = arith.constant 0 : i32
    return %arg0, %c0_i32 : i32, i32
  }
}

</mosaic_0001>

<llo_original>
// kernel: conv_neural_network_forward.1
$region0: #{conv_neural_network_forward.1}
  #allocation0 [shape = 'u32[]', space=smem, size = 0x4, offset = 0x4, fixed_abs, tag = 'smem constant byte address 0x4 - core index']
  #allocation1 [shape = 'u32[72,128]{1,0:T(1,128)}', space=vmem, size = 0x9000, scoped, tag = 'internal scratch']
  %s0 = inlined_call_operand.vmem [shape: f32[16,768], index: 0, kind: input, shape index: {}]
  %s1 = inlined_call_operand.hbm [shape: bf16[768,512], index: 1, kind: input, shape index: {}]
  %s2 = inlined_call_operand.hbm [shape: bf16[512,512], index: 2, kind: input, shape index: {}]
  %s3 = inlined_call_operand.hbm [shape: bf16[512,128], index: 3, kind: input, shape index: {}]
  %s4 = inlined_call_operand.vmem [shape: f32[3,512], index: 4, kind: input, shape index: {}]
  %s5 = inlined_call_operand.vmem [shape: f32[16,128], index: 5, kind: output, shape index: {}]
  %s6 = sld [smem:[#allocation0]]
  $region42: #{conv_neural_network_forward.1} parent=0
    _
  %s8 = ssub.s32 1, %s6
  %s9 = scalar_select 0, %s8, %s6
  $region1: #{conv_neural_network_forward.1} parent=0
    #allocation2 [shape = 'u8[786432]{0}', space=vmem, size = 0xc0000, scoped, tag = 'input window, operand 1, single buffered']
    #allocation3 [shape = 's32[1]{0}', space=sflag, size = 0x4, scoped, tag = 'scoped memory for conv_neural_network_forward.1']
    #allocation4 [shape = 'u8[524288]{0}', space=vmem, size = 0x80000, scoped, tag = 'input window, operand 2, single buffered']
    #allocation5 [shape = 's32[1]{0}', space=sflag, size = 0x4, scoped, tag = 'scoped memory for conv_neural_network_forward.1']
    #allocation6 [shape = 'u8[131072]{0}', space=vmem, size = 0x20000, scoped, tag = 'input window, operand 3, single buffered']
    %10 = vsyncpa [#allocation3], 0
    %11 = vsyncpa [#allocation5], 0
    // Predicated region
    $region2: #{conv_neural_network_forward.1} parent=1 // pred_check
      _
    $region3: #{conv_neural_network_forward.1} parent=1 // pred_check_branch
      %13 = sbr.rel (0) target = $region5
    $region4: #{conv_neural_network_forward.1} parent=1 // pred_region
      _
    $region5: #{conv_neural_network_forward.1} parent=1 // pred_fallthru
      _
    // Predicated region
    $region6: #{conv_neural_network_forward.1} parent=1 // pred_check
      _
    $region7: #{conv_neural_network_forward.1} parent=1 // pred_check_branch
      %15 = sbr.rel (0) target = $region9
    $region8: #{conv_neural_network_forward.1} parent=1 // pred_region
      %17 = vsyncadd [#allocation3], 0
      %s18 = sshll.u32 %s1, 4
      %s19 = int_to_ptr.hbm [resolvable:$true] %s18
      %s20 = sshll.u32 [#allocation2], 4
      %s21 = int_to_ptr.vmem [resolvable:$true] %s20
      %26 = dma.hbm_to_vmem [thread:$0]  %s19, 24576, %s21, [#allocation3], 256, 256, 16
    $region9: #{conv_neural_network_forward.1} parent=1 // pred_fallthru
      _
    // Predicated region
    $region10: #{conv_neural_network_forward.1} parent=1 // pred_check
      _
    $region11: #{conv_neural_network_forward.1} parent=1 // pred_check_branch
      %28 = sbr.rel (0) target = $region13
    $region12: #{conv_neural_network_forward.1} parent=1 // pred_region
      %30 = vsyncadd [#allocation5], 0
      %s31 = sshll.u32 %s2, 4
      %s32 = int_to_ptr.hbm [resolvable:$true] %s31
      %s33 = sshll.u32 [#allocation4], 4
      %s34 = int_to_ptr.vmem [resolvable:$true] %s33
      %39 = dma.hbm_to_vmem [thread:$0]  %s32, 16384, %s34, [#allocation5], 256, 256, 16
    $region13: #{conv_neural_network_forward.1} parent=1 // pred_fallthru
      _
    // Predicated region
    $region14: #{conv_neural_network_forward.1} parent=1 // pred_check
      _
    $region15: #{conv_neural_network_forward.1} parent=1 // pred_check_branch
      %41 = sbr.rel (0) target = $region17
    $region16: #{conv_neural_network_forward.1} parent=1 // pred_region
      %43 = vsyncadd [#allocation5], 0
      %s44 = sshll.u32 %s3, 4
      %s45 = int_to_ptr.hbm [resolvable:$true] %s44
      %s46 = sshll.u32 [#allocation6], 4
      %s47 = int_to_ptr.vmem [resolvable:$true] %s46
      %52 = dma.hbm_to_vmem [thread:$0]  %s45, 4096, %s47, [#allocation5], 64, 64, 4
    $region17: #{conv_neural_network_forward.1} parent=1 // pred_fallthru
      _
    // Predicated region
    $region18: #{conv_neural_network_forward.1} parent=1 // pred_check
      _
    $region19: #{conv_neural_network_forward.1} parent=1 // pred_check_branch
      %54 = sbr.rel (0) target = $region21
    $region20: #{conv_neural_network_forward.1} parent=1 // pred_region
      _
    $region21: #{conv_neural_network_forward.1} parent=1 // pred_fallthru
      _
    // Predicated region
    $region22: #{conv_neural_network_forward.1} parent=1 // pred_check
      _
    $region23: #{conv_neural_network_forward.1} parent=1 // pred_check_branch
      %56 = sbr.rel (0) target = $region25
    $region24: #{conv_neural_network_forward.1} parent=1 // pred_region
      %58 = dma.done [#allocation3], 24576
    $region25: #{conv_neural_network_forward.1} parent=1 // pred_fallthru
      _
    // Predicated region
    $region26: #{conv_neural_network_forward.1} parent=1 // pred_check
      _
    $region27: #{conv_neural_network_forward.1} parent=1 // pred_check_branch
      %60 = sbr.rel (0) target = $region29
    $region28: #{conv_neural_network_forward.1} parent=1 // pred_region
      %62 = dma.done [#allocation5], 16384
    $region29: #{conv_neural_network_forward.1} parent=1 // pred_fallthru
      _
    // Predicated region
    $region30: #{conv_neural_network_forward.1} parent=1 // pred_check
      _
    $region31: #{conv_neural_network_forward.1} parent=1 // pred_check_branch
      %64 = sbr.rel (0) target = $region33
    $region32: #{conv_neural_network_forward.1} parent=1 // pred_region
      %66 = dma.done [#allocation5], 4096
    $region33: #{conv_neural_network_forward.1} parent=1 // pred_fallthru
      _
    %v67 = vld [vmem:[%s0] sm:$0xff]
    %v68 = vld [vmem:[%s0 + $0x8] sm:$0xff]
    %v69 = vld [vmem:[%s0 + $0x10] sm:$0xff]
    %v70 = vld [vmem:[%s0 + $0x18] sm:$0xff]
    %v71 = vld [vmem:[%s0 + $0x20] sm:$0xff]
    %v72 = vld [vmem:[%s0 + $0x28] sm:$0xff]
    %v73 = vld [vmem:[%s0 + $0x30] sm:$0xff]
    %v74 = vld [vmem:[%s0 + $0x38] sm:$0xff]
    %v75 = vld [vmem:[%s0 + $0x40] sm:$0xff]
    %v76 = vld [vmem:[%s0 + $0x48] sm:$0xff]
    %v77 = vld [vmem:[%s0 + $0x50] sm:$0xff]
    %v78 = vld [vmem:[%s0 + $0x58] sm:$0xff]
    %v79 = vpack.c.bf16 %v73, %v67
    %v80 = vpack.c.bf16 %v74, %v68
    %v81 = vpack.c.bf16 %v75, %v69
    %v82 = vpack.c.bf16 %v76, %v70
    %v83 = vpack.c.bf16 %v77, %v71
    %v84 = vpack.c.bf16 %v78, %v72
    %v85 = vld [vmem:[%s4] ss:$4 sm:$0xf]
    %s86 = scalar_lea.vmem %s4, 1
    %v87 = vld [vmem:[%s86] ss:$4 sm:$0xf]
    %v88 = vld [vmem:[%s4 + $0x2] sm:$0x1]
    %v89 = vld [vmem:[#allocation2] sm:$0xff]
    %v90 = vld [vmem:[#allocation2 + $0x8] sm:$0xff]
    %v91 = vld [vmem:[#allocation2 + $0x10] sm:$0xff]
    %v92 = vld [vmem:[#allocation2 + $0x18] sm:$0xff]
    %v93 = vld [vmem:[#allocation2 + $0x20] sm:$0xff]
    %v94 = vld [vmem:[#allocation2 + $0x28] sm:$0xff]
    %v95 = vld [vmem:[#allocation2 + $0x30] sm:$0xff]
    %v96 = vld [vmem:[#allocation2 + $0x38] sm:$0xff]
    %v97 = vld [vmem:[#allocation2 + $0x40] sm:$0xff]
    %v98 = vld [vmem:[#allocation2 + $0x48] sm:$0xff]
    %v99 = vld [vmem:[#allocation2 + $0x50] sm:$0xff]
    %v100 = vld [vmem:[#allocation2 + $0x58] sm:$0xff]
    %v101 = vld [vmem:[#allocation2 + $0x60] sm:$0xff]
    %v102 = vld [vmem:[#allocation2 + $0x68] sm:$0xff]
    %v103 = vld [vmem:[#allocation2 + $0x70] sm:$0xff]
    %v104 = vld [vmem:[#allocation2 + $0x78] sm:$0xff]
    %v105 = vld [vmem:[#allocation2 + $0x80] sm:$0xff]
    %v106 = vld [vmem:[#allocation2 + $0x88] sm:$0xff]
    %v107 = vld [vmem:[#allocation2 + $0x90] sm:$0xff]
    %v108 = vld [vmem:[#allocation2 + $0x98] sm:$0xff]
    %v109 = vld [vmem:[#allocation2 + $0xa0] sm:$0xff]
    %v110 = vld [vmem:[#allocation2 + $0xa8] sm:$0xff]
    %v111 = vld [vmem:[#allocation2 + $0xb0] sm:$0xff]
    %v112 = vld [vmem:[#allocation2 + $0xb8] sm:$0xff]
    %v113 = vld [vmem:[#allocation2 + $0xc0] sm:$0xff]
    %v114 = vld [vmem:[#allocation2 + $0xc8] sm:$0xff]
    %v115 = vld [vmem:[#allocation2 + $0xd0] sm:$0xff]
    %v116 = vld [vmem:[#allocation2 + $0xd8] sm:$0xff]
    %v117 = vld [vmem:[#allocation2 + $0xe0] sm:$0xff]
    %v118 = vld [vmem:[#allocation2 + $0xe8] sm:$0xff]
    %v119 = vld [vmem:[#allocation2 + $0xf0] sm:$0xff]
    %v120 = vld [vmem:[#allocation2 + $0xf8] sm:$0xff]
    %v121 = vld [vmem:[#allocation2 + $0x100] sm:$0xff]
    %v122 = vld [vmem:[#allocation2 + $0x108] sm:$0xff]
    %v123 = vld [vmem:[#allocation2 + $0x110] sm:$0xff]
    %v124 = vld [vmem:[#allocation2 + $0x118] sm:$0xff]
    %v125 = vld [vmem:[#allocation2 + $0x120] sm:$0xff]
    %v126 = vld [vmem:[#allocation2 + $0x128] sm:$0xff]
    %v127 = vld [vmem:[#allocation2 + $0x130] sm:$0xff]
    %v128 = vld [vmem:[#allocation2 + $0x138] sm:$0xff]
    %v129 = vld [vmem:[#allocation2 + $0x140] sm:$0xff]
    %v130 = vld [vmem:[#allocation2 + $0x148] sm:$0xff]
    %v131 = vld [vmem:[#allocation2 + $0x150] sm:$0xff]
    %v132 = vld [vmem:[#allocation2 + $0x158] sm:$0xff]
    %v133 = vld [vmem:[#allocation2 + $0x160] sm:$0xff]
    %v134 = vld [vmem:[#allocation2 + $0x168] sm:$0xff]
    %v135 = vld [vmem:[#allocation2 + $0x170] sm:$0xff]
    %v136 = vld [vmem:[#allocation2 + $0x178] sm:$0xff]
    %v137 = vld [vmem:[#allocation2 + $0x180] sm:$0xff]
    %v138 = vld [vmem:[#allocation2 + $0x188] sm:$0xff]
    %v139 = vld [vmem:[#allocation2 + $0x190] sm:$0xff]
    %v140 = vld [vmem:[#allocation2 + $0x198] sm:$0xff]
    %v141 = vld [vmem:[#allocation2 + $0x1a0] sm:$0xff]
    %v142 = vld [vmem:[#allocation2 + $0x1a8] sm:$0xff]
    %v143 = vld [vmem:[#allocation2 + $0x1b0] sm:$0xff]
    %v144 = vld [vmem:[#allocation2 + $0x1b8] sm:$0xff]
    %v145 = vld [vmem:[#allocation2 + $0x1c0] sm:$0xff]
    %v146 = vld [vmem:[#allocation2 + $0x1c8] sm:$0xff]
    %v147 = vld [vmem:[#allocation2 + $0x1d0] sm:$0xff]
    %v148 = vld [vmem:[#allocation2 + $0x1d8] sm:$0xff]
    %v149 = vld [vmem:[#allocation2 + $0x1e0] sm:$0xff]
    %v150 = vld [vmem:[#allocation2 + $0x1e8] sm:$0xff]
    %v151 = vld [vmem:[#allocation2 + $0x1f0] sm:$0xff]
    %v152 = vld [vmem:[#allocation2 + $0x1f8] sm:$0xff]
    %v153 = vld [vmem:[#allocation2 + $0x200] sm:$0xff]
    %v154 = vld [vmem:[#allocation2 + $0x208] sm:$0xff]
    %v155 = vld [vmem:[#allocation2 + $0x210] sm:$0xff]
    %v156 = vld [vmem:[#allocation2 + $0x218] sm:$0xff]
    %v157 = vld [vmem:[#allocation2 + $0x220] sm:$0xff]
    %v158 = vld [vmem:[#allocation2 + $0x228] sm:$0xff]
    %v159 = vld [vmem:[#allocation2 + $0x230] sm:$0xff]
    %v160 = vld [vmem:[#allocation2 + $0x238] sm:$0xff]
    %v161 = vld [vmem:[#allocation2 + $0x240] sm:$0xff]
    %v162 = vld [vmem:[#allocation2 + $0x248] sm:$0xff]
    %v163 = vld [vmem:[#allocation2 + $0x250] sm:$0xff]
    %v164 = vld [vmem:[#allocation2 + $0x258] sm:$0xff]
    %v165 = vld [vmem:[#allocation2 + $0x260] sm:$0xff]
    %v166 = vld [vmem:[#allocation2 + $0x268] sm:$0xff]
    %v167 = vld [vmem:[#allocation2 + $0x270] sm:$0xff]
    %v168 = vld [vmem:[#allocation2 + $0x278] sm:$0xff]
    %v169 = vld [vmem:[#allocation2 + $0x280] sm:$0xff]
    %v170 = vld [vmem:[#allocation2 + $0x288] sm:$0xff]
    %v171 = vld [vmem:[#allocation2 + $0x290] sm:$0xff]
    %v172 = vld [vmem:[#allocation2 + $0x298] sm:$0xff]
    %v173 = vld [vmem:[#allocation2 + $0x2a0] sm:$0xff]
    %v174 = vld [vmem:[#allocation2 + $0x2a8] sm:$0xff]
    %v175 = vld [vmem:[#allocation2 + $0x2b0] sm:$0xff]
    %v176 = vld [vmem:[#allocation2 + $0x2b8] sm:$0xff]
    %v177 = vld [vmem:[#allocation2 + $0x2c0] sm:$0xff]
    %v178 = vld [vmem:[#allocation2 + $0x2c8] sm:$0xff]
    %v179 = vld [vmem:[#allocation2 + $0x2d0] sm:$0xff]
    %v180 = vld [vmem:[#allocation2 + $0x2d8] sm:$0xff]
    %v181 = vld [vmem:[#allocation2 + $0x2e0] sm:$0xff]
    %v182 = vld [vmem:[#allocation2 + $0x2e8] sm:$0xff]
    %v183 = vld [vmem:[#allocation2 + $0x2f0] sm:$0xff]
    %v184 = vld [vmem:[#allocation2 + $0x2f8] sm:$0xff]
    %v185 = vld [vmem:[#allocation2 + $0x300] sm:$0xff]
    %v186 = vld [vmem:[#allocation2 + $0x308] sm:$0xff]
    %v187 = vld [vmem:[#allocation2 + $0x310] sm:$0xff]
    %v188 = vld [vmem:[#allocation2 + $0x318] sm:$0xff]
    %v189 = vld [vmem:[#allocation2 + $0x320] sm:$0xff]
    %v190 = vld [vmem:[#allocation2 + $0x328] sm:$0xff]
    %v191 = vld [vmem:[#allocation2 + $0x330] sm:$0xff]
    %v192 = vld [vmem:[#allocation2 + $0x338] sm:$0xff]
    %v193 = vld [vmem:[#allocation2 + $0x340] sm:$0xff]
    %v194 = vld [vmem:[#allocation2 + $0x348] sm:$0xff]
    %v195 = vld [vmem:[#allocation2 + $0x350] sm:$0xff]
    %v196 = vld [vmem:[#allocation2 + $0x358] sm:$0xff]
    %v197 = vld [vmem:[#allocation2 + $0x360] sm:$0xff]
    %v198 = vld [vmem:[#allocation2 + $0x368] sm:$0xff]
    %v199 = vld [vmem:[#allocation2 + $0x370] sm:$0xff]
    %v200 = vld [vmem:[#allocation2 + $0x378] sm:$0xff]
    %v201 = vld [vmem:[#allocation2 + $0x380] sm:$0xff]
    %v202 = vld [vmem:[#allocation2 + $0x388] sm:$0xff]
    %v203 = vld [vmem:[#allocation2 + $0x390] sm:$0xff]
    %v204 = vld [vmem:[#allocation2 + $0x398] sm:$0xff]
    %v205 = vld [vmem:[#allocation2 + $0x3a0] sm:$0xff]
    %v206 = vld [vmem:[#allocation2 + $0x3a8] sm:$0xff]
    %v207 = vld [vmem:[#allocation2 + $0x3b0] sm:$0xff]
    %v208 = vld [vmem:[#allocation2 + $0x3b8] sm:$0xff]
    %v209 = vld [vmem:[#allocation2 + $0x3c0] sm:$0xff]
    %v210 = vld [vmem:[#allocation2 + $0x3c8] sm:$0xff]
    %v211 = vld [vmem:[#allocation2 + $0x3d0] sm:$0xff]
    %v212 = vld [vmem:[#allocation2 + $0x3d8] sm:$0xff]
    %v213 = vld [vmem:[#allocation2 + $0x3e0] sm:$0xff]
    %v214 = vld [vmem:[#allocation2 + $0x3e8] sm:$0xff]
    %v215 = vld [vmem:[#allocation2 + $0x3f0] sm:$0xff]
    %v216 = vld [vmem:[#allocation2 + $0x3f8] sm:$0xff]
    %v217 = vld [vmem:[#allocation2 + $0x400] sm:$0xff]
    %v218 = vld [vmem:[#allocation2 + $0x408] sm:$0xff]
    %v219 = vld [vmem:[#allocation2 + $0x410] sm:$0xff]
    %v220 = vld [vmem:[#allocation2 + $0x418] sm:$0xff]
    %v221 = vld [vmem:[#allocation2 + $0x420] sm:$0xff]
    %v222 = vld [vmem:[#allocation2 + $0x428] sm:$0xff]
    %v223 = vld [vmem:[#allocation2 + $0x430] sm:$0xff]
    %v224 = vld [vmem:[#allocation2 + $0x438] sm:$0xff]
    %v225 = vld [vmem:[#allocation2 + $0x440] sm:$0xff]
    %v226 = vld [vmem:[#allocation2 + $0x448] sm:$0xff]
    %v227 = vld [vmem:[#allocation2 + $0x450] sm:$0xff]
    %v228 = vld [vmem:[#allocation2 + $0x458] sm:$0xff]
    %v229 = vld [vmem:[#allocation2 + $0x460] sm:$0xff]
    %v230 = vld [vmem:[#allocation2 + $0x468] sm:$0xff]
    %v231 = vld [vmem:[#allocation2 + $0x470] sm:$0xff]
    %v232 = vld [vmem:[#allocation2 + $0x478] sm:$0xff]
    %v233 = vld [vmem:[#allocation2 + $0x480] sm:$0xff]
    %v234 = vld [vmem:[#allocation2 + $0x488] sm:$0xff]
    %v235 = vld [vmem:[#allocation2 + $0x490] sm:$0xff]
    %v236 = vld [vmem:[#allocation2 + $0x498] sm:$0xff]
    %v237 = vld [vmem:[#allocation2 + $0x4a0] sm:$0xff]
    %v238 = vld [vmem:[#allocation2 + $0x4a8] sm:$0xff]
    %v239 = vld [vmem:[#allocation2 + $0x4b0] sm:$0xff]
    %v240 = vld [vmem:[#allocation2 + $0x4b8] sm:$0xff]
    %v241 = vld [vmem:[#allocation2 + $0x4c0] sm:$0xff]
    %v242 = vld [vmem:[#allocation2 + $0x4c8] sm:$0xff]
    %v243 = vld [vmem:[#allocation2 + $0x4d0] sm:$0xff]
    %v244 = vld [vmem:[#allocation2 + $0x4d8] sm:$0xff]
    %v245 = vld [vmem:[#allocation2 + $0x4e0] sm:$0xff]
    %v246 = vld [vmem:[#allocation2 + $0x4e8] sm:$0xff]
    %v247 = vld [vmem:[#allocation2 + $0x4f0] sm:$0xff]
    %v248 = vld [vmem:[#allocation2 + $0x4f8] sm:$0xff]
    %v249 = vld [vmem:[#allocation2 + $0x500] sm:$0xff]
    %v250 = vld [vmem:[#allocation2 + $0x508] sm:$0xff]
    %v251 = vld [vmem:[#allocation2 + $0x510] sm:$0xff]
    %v252 = vld [vmem:[#allocation2 + $0x518] sm:$0xff]
    %v253 = vld [vmem:[#allocation2 + $0x520] sm:$0xff]
    %v254 = vld [vmem:[#allocation2 + $0x528] sm:$0xff]
    %v255 = vld [vmem:[#allocation2 + $0x530] sm:$0xff]
    %v256 = vld [vmem:[#allocation2 + $0x538] sm:$0xff]
    %v257 = vld [vmem:[#allocation2 + $0x540] sm:$0xff]
    %v258 = vld [vmem:[#allocation2 + $0x548] sm:$0xff]
    %v259 = vld [vmem:[#allocation2 + $0x550] sm:$0xff]
    %v260 = vld [vmem:[#allocation2 + $0x558] sm:$0xff]
    %v261 = vld [vmem:[#allocation2 + $0x560] sm:$0xff]
    %v262 = vld [vmem:[#allocation2 + $0x568] sm:$0xff]
    %v263 = vld [vmem:[#allocation2 + $0x570] sm:$0xff]
    %v264 = vld [vmem:[#allocation2 + $0x578] sm:$0xff]
    %v265 = vld [vmem:[#allocation2 + $0x580] sm:$0xff]
    %v266 = vld [vmem:[#allocation2 + $0x588] sm:$0xff]
    %v267 = vld [vmem:[#allocation2 + $0x590] sm:$0xff]
    %v268 = vld [vmem:[#allocation2 + $0x598] sm:$0xff]
    %v269 = vld [vmem:[#allocation2 + $0x5a0] sm:$0xff]
    %v270 = vld [vmem:[#allocation2 + $0x5a8] sm:$0xff]
    %v271 = vld [vmem:[#allocation2 + $0x5b0] sm:$0xff]
    %v272 = vld [vmem:[#allocation2 + $0x5b8] sm:$0xff]
    %v273 = vld [vmem:[#allocation2 + $0x5c0] sm:$0xff]
    %v274 = vld [vmem:[#allocation2 + $0x5c8] sm:$0xff]
    %v275 = vld [vmem:[#allocation2 + $0x5d0] sm:$0xff]
    %v276 = vld [vmem:[#allocation2 + $0x5d8] sm:$0xff]
    %v277 = vld [vmem:[#allocation2 + $0x5e0] sm:$0xff]
    %v278 = vld [vmem:[#allocation2 + $0x5e8] sm:$0xff]
    %v279 = vld [vmem:[#allocation2 + $0x5f0] sm:$0xff]
    %v280 = vld [vmem:[#allocation2 + $0x5f8] sm:$0xff]
    %v282 = vperm.slane %v85, 0
    %v283 = vperm.slane %v85, 1
    %v284 = vperm.slane %v85, 2
    %v285 = vperm.slane %v85, 3
    %v482 = vunpack.c.l.b16 %v89
    %v483 = vunpack.c.h.b16 %v89
    %v484 = vunpack.c.l.b16 %v90
    %v485 = vunpack.c.h.b16 %v90
    %v486 = vunpack.c.l.b16 %v91
    %v487 = vunpack.c.h.b16 %v91
    %v488 = vunpack.c.l.b16 %v92
    %v489 = vunpack.c.h.b16 %v92
    %v490 = vunpack.c.l.b16 %v93
    %v491 = vunpack.c.h.b16 %v93
    %v492 = vunpack.c.l.b16 %v94
    %v493 = vunpack.c.h.b16 %v94
    %v494 = vunpack.c.l.b16 %v95
    %v495 = vunpack.c.h.b16 %v95
    %v496 = vunpack.c.l.b16 %v96
    %v497 = vunpack.c.h.b16 %v96
    %v498 = vunpack.c.l.b16 %v97
    %v499 = vunpack.c.h.b16 %v97
    %v500 = vunpack.c.l.b16 %v98
    %v501 = vunpack.c.h.b16 %v98
    %v502 = vunpack.c.l.b16 %v99
    %v503 = vunpack.c.h.b16 %v99
    %v504 = vunpack.c.l.b16 %v100
    %v505 = vunpack.c.h.b16 %v100
    %v506 = vunpack.c.l.b16 %v101
    %v507 = vunpack.c.h.b16 %v101
    %v508 = vunpack.c.l.b16 %v102
    %v509 = vunpack.c.h.b16 %v102
    %v510 = vunpack.c.l.b16 %v103
    %v511 = vunpack.c.h.b16 %v103
    %v512 = vunpack.c.l.b16 %v104
    %v513 = vunpack.c.h.b16 %v104
    %v514 = vunpack.c.l.b16 %v105
    %v515 = vunpack.c.h.b16 %v105
    %v516 = vunpack.c.l.b16 %v106
    %v517 = vunpack.c.h.b16 %v106
    %v518 = vunpack.c.l.b16 %v107
    %v519 = vunpack.c.h.b16 %v107
    %v520 = vunpack.c.l.b16 %v108
    %v521 = vunpack.c.h.b16 %v108
    %v522 = vunpack.c.l.b16 %v109
    %v523 = vunpack.c.h.b16 %v109
    %v524 = vunpack.c.l.b16 %v110
    %v525 = vunpack.c.h.b16 %v110
    %v526 = vunpack.c.l.b16 %v111
    %v527 = vunpack.c.h.b16 %v111
    %v528 = vunpack.c.l.b16 %v112
    %v529 = vunpack.c.h.b16 %v112
    %v530 = vunpack.c.l.b16 %v113
    %v531 = vunpack.c.h.b16 %v113
    %v532 = vunpack.c.l.b16 %v114
    %v533 = vunpack.c.h.b16 %v114
    %v534 = vunpack.c.l.b16 %v115
    %v535 = vunpack.c.h.b16 %v115
    %v536 = vunpack.c.l.b16 %v116
    %v537 = vunpack.c.h.b16 %v116
    %v538 = vunpack.c.l.b16 %v117
    %v539 = vunpack.c.h.b16 %v117
    %v540 = vunpack.c.l.b16 %v118
    %v541 = vunpack.c.h.b16 %v118
    %v542 = vunpack.c.l.b16 %v119
    %v543 = vunpack.c.h.b16 %v119
    %v544 = vunpack.c.l.b16 %v120
    %v545 = vunpack.c.h.b16 %v120
    %v546 = vunpack.c.l.b16 %v121
    %v547 = vunpack.c.h.b16 %v121
    %v548 = vunpack.c.l.b16 %v122
    %v549 = vunpack.c.h.b16 %v122
    %v550 = vunpack.c.l.b16 %v123
    %v551 = vunpack.c.h.b16 %v123
    %v552 = vunpack.c.l.b16 %v124
    %v553 = vunpack.c.h.b16 %v124
    %v554 = vunpack.c.l.b16 %v125
    %v555 = vunpack.c.h.b16 %v125
    %v556 = vunpack.c.l.b16 %v126
    %v557 = vunpack.c.h.b16 %v126
    %v558 = vunpack.c.l.b16 %v127
    %v559 = vunpack.c.h.b16 %v127
    %v560 = vunpack.c.l.b16 %v128
    %v561 = vunpack.c.h.b16 %v128
    %v562 = vunpack.c.l.b16 %v129
    %v563 = vunpack.c.h.b16 %v129
    %v564 = vunpack.c.l.b16 %v130
    %v565 = vunpack.c.h.b16 %v130
    %v566 = vunpack.c.l.b16 %v131
    %v567 = vunpack.c.h.b16 %v131
    %v568 = vunpack.c.l.b16 %v132
    %v569 = vunpack.c.h.b16 %v132
    %v570 = vunpack.c.l.b16 %v133
    %v571 = vunpack.c.h.b16 %v133
    %v572 = vunpack.c.l.b16 %v134
    %v573 = vunpack.c.h.b16 %v134
    %v574 = vunpack.c.l.b16 %v135
    %v575 = vunpack.c.h.b16 %v135
    %v576 = vunpack.c.l.b16 %v136
    %v577 = vunpack.c.h.b16 %v136
    %v578 = vunpack.c.l.b16 %v137
    %v579 = vunpack.c.h.b16 %v137
    %v580 = vunpack.c.l.b16 %v138
    %v581 = vunpack.c.h.b16 %v138
    %v582 = vunpack.c.l.b16 %v139
    %v583 = vunpack.c.h.b16 %v139
    %v584 = vunpack.c.l.b16 %v140
    %v585 = vunpack.c.h.b16 %v140
    %v586 = vunpack.c.l.b16 %v141
    %v587 = vunpack.c.h.b16 %v141
    %v588 = vunpack.c.l.b16 %v142
    %v589 = vunpack.c.h.b16 %v142
    %v590 = vunpack.c.l.b16 %v143
    %v591 = vunpack.c.h.b16 %v143
    %v592 = vunpack.c.l.b16 %v144
    %v593 = vunpack.c.h.b16 %v144
    %v594 = vunpack.c.l.b16 %v145
    %v595 = vunpack.c.h.b16 %v145
    %v596 = vunpack.c.l.b16 %v146
    %v597 = vunpack.c.h.b16 %v146
    %v598 = vunpack.c.l.b16 %v147
    %v599 = vunpack.c.h.b16 %v147
    %v600 = vunpack.c.l.b16 %v148
    %v601 = vunpack.c.h.b16 %v148
    %v602 = vunpack.c.l.b16 %v149
    %v603 = vunpack.c.h.b16 %v149
    %v604 = vunpack.c.l.b16 %v150
    %v605 = vunpack.c.h.b16 %v150
    %v606 = vunpack.c.l.b16 %v151
    %v607 = vunpack.c.h.b16 %v151
    %v608 = vunpack.c.l.b16 %v152
    %v609 = vunpack.c.h.b16 %v152
    %v610 = vunpack.c.l.b16 %v153
    %v611 = vunpack.c.h.b16 %v153
    %v612 = vunpack.c.l.b16 %v154
    %v613 = vunpack.c.h.b16 %v154
    %v614 = vunpack.c.l.b16 %v155
    %v615 = vunpack.c.h.b16 %v155
    %v616 = vunpack.c.l.b16 %v156
    %v617 = vunpack.c.h.b16 %v156
    %v618 = vunpack.c.l.b16 %v157
    %v619 = vunpack.c.h.b16 %v157
    %v620 = vunpack.c.l.b16 %v158
    %v621 = vunpack.c.h.b16 %v158
    %v622 = vunpack.c.l.b16 %v159
    %v623 = vunpack.c.h.b16 %v159
    %v624 = vunpack.c.l.b16 %v160
    %v625 = vunpack.c.h.b16 %v160
    %v626 = vunpack.c.l.b16 %v161
    %v627 = vunpack.c.h.b16 %v161
    %v628 = vunpack.c.l.b16 %v162
    %v629 = vunpack.c.h.b16 %v162
    %v630 = vunpack.c.l.b16 %v163
    %v631 = vunpack.c.h.b16 %v163
    %v632 = vunpack.c.l.b16 %v164
    %v633 = vunpack.c.h.b16 %v164
    %v634 = vunpack.c.l.b16 %v165
    %v635 = vunpack.c.h.b16 %v165
    %v636 = vunpack.c.l.b16 %v166
    %v637 = vunpack.c.h.b16 %v166
    %v638 = vunpack.c.l.b16 %v167
    %v639 = vunpack.c.h.b16 %v167
    %v640 = vunpack.c.l.b16 %v168
    %v641 = vunpack.c.h.b16 %v168
    %v642 = vunpack.c.l.b16 %v169
    %v643 = vunpack.c.h.b16 %v169
    %v644 = vunpack.c.l.b16 %v170
    %v645 = vunpack.c.h.b16 %v170
    %v646 = vunpack.c.l.b16 %v171
    %v647 = vunpack.c.h.b16 %v171
    %v648 = vunpack.c.l.b16 %v172
    %v649 = vunpack.c.h.b16 %v172
    %v650 = vunpack.c.l.b16 %v173
    %v651 = vunpack.c.h.b16 %v173
    %v652 = vunpack.c.l.b16 %v174
    %v653 = vunpack.c.h.b16 %v174
    %v654 = vunpack.c.l.b16 %v175
    %v655 = vunpack.c.h.b16 %v175
    %v656 = vunpack.c.l.b16 %v176
    %v657 = vunpack.c.h.b16 %v176
    %v658 = vunpack.c.l.b16 %v177
    %v659 = vunpack.c.h.b16 %v177
    %v660 = vunpack.c.l.b16 %v178
    %v661 = vunpack.c.h.b16 %v178
    %v662 = vunpack.c.l.b16 %v179
    %v663 = vunpack.c.h.b16 %v179
    %v664 = vunpack.c.l.b16 %v180
    %v665 = vunpack.c.h.b16 %v180
    %v666 = vunpack.c.l.b16 %v181
    %v667 = vunpack.c.h.b16 %v181
    %v668 = vunpack.c.l.b16 %v182
    %v669 = vunpack.c.h.b16 %v182
    %v670 = vunpack.c.l.b16 %v183
    %v671 = vunpack.c.h.b16 %v183
    %v672 = vunpack.c.l.b16 %v184
    %v673 = vunpack.c.h.b16 %v184
    %v674 = vunpack.c.l.b16 %v185
    %v675 = vunpack.c.h.b16 %v185
    %v676 = vunpack.c.l.b16 %v186
    %v677 = vunpack.c.h.b16 %v186
    %v678 = vunpack.c.l.b16 %v187
    %v679 = vunpack.c.h.b16 %v187
    %v680 = vunpack.c.l.b16 %v188
    %v681 = vunpack.c.h.b16 %v188
    %v682 = vunpack.c.l.b16 %v189
    %v683 = vunpack.c.h.b16 %v189
    %v684 = vunpack.c.l.b16 %v190
    %v685 = vunpack.c.h.b16 %v190
    %v686 = vunpack.c.l.b16 %v191
    %v687 = vunpack.c.h.b16 %v191
    %v688 = vunpack.c.l.b16 %v192
    %v689 = vunpack.c.h.b16 %v192
    %v690 = vunpack.c.l.b16 %v193
    %v691 = vunpack.c.h.b16 %v193
    %v692 = vunpack.c.l.b16 %v194
    %v693 = vunpack.c.h.b16 %v194
    %v694 = vunpack.c.l.b16 %v195
    %v695 = vunpack.c.h.b16 %v195
    %v696 = vunpack.c.l.b16 %v196
    %v697 = vunpack.c.h.b16 %v196
    %v698 = vunpack.c.l.b16 %v197
    %v699 = vunpack.c.h.b16 %v197
    %v700 = vunpack.c.l.b16 %v198
    %v701 = vunpack.c.h.b16 %v198
    %v702 = vunpack.c.l.b16 %v199
    %v703 = vunpack.c.h.b16 %v199
    %v704 = vunpack.c.l.b16 %v200
    %v705 = vunpack.c.h.b16 %v200
    %v706 = vunpack.c.l.b16 %v201
    %v707 = vunpack.c.h.b16 %v201
    %v708 = vunpack.c.l.b16 %v202
    %v709 = vunpack.c.h.b16 %v202
    %v710 = vunpack.c.l.b16 %v203
    %v711 = vunpack.c.h.b16 %v203
    %v712 = vunpack.c.l.b16 %v204
    %v713 = vunpack.c.h.b16 %v204
    %v714 = vunpack.c.l.b16 %v205
    %v715 = vunpack.c.h.b16 %v205
    %v716 = vunpack.c.l.b16 %v206
    %v717 = vunpack.c.h.b16 %v206
    %v718 = vunpack.c.l.b16 %v207
    %v719 = vunpack.c.h.b16 %v207
    %v720 = vunpack.c.l.b16 %v208
    %v721 = vunpack.c.h.b16 %v208
    %v722 = vunpack.c.l.b16 %v209
    %v723 = vunpack.c.h.b16 %v209
    %v724 = vunpack.c.l.b16 %v210
    %v725 = vunpack.c.h.b16 %v210
    %v726 = vunpack.c.l.b16 %v211
    %v727 = vunpack.c.h.b16 %v211
    %v728 = vunpack.c.l.b16 %v212
    %v729 = vunpack.c.h.b16 %v212
    %v730 = vunpack.c.l.b16 %v213
    %v731 = vunpack.c.h.b16 %v213
    %v732 = vunpack.c.l.b16 %v214
    %v733 = vunpack.c.h.b16 %v214
    %v734 = vunpack.c.l.b16 %v215
    %v735 = vunpack.c.h.b16 %v215
    %v736 = vunpack.c.l.b16 %v216
    %v737 = vunpack.c.h.b16 %v216
    %v738 = vunpack.c.l.b16 %v217
    %v739 = vunpack.c.h.b16 %v217
    %v740 = vunpack.c.l.b16 %v218
    %v741 = vunpack.c.h.b16 %v218
    %v742 = vunpack.c.l.b16 %v219
    %v743 = vunpack.c.h.b16 %v219
    %v744 = vunpack.c.l.b16 %v220
    %v745 = vunpack.c.h.b16 %v220
    %v746 = vunpack.c.l.b16 %v221
    %v747 = vunpack.c.h.b16 %v221
    %v748 = vunpack.c.l.b16 %v222
    %v749 = vunpack.c.h.b16 %v222
    %v750 = vunpack.c.l.b16 %v223
    %v751 = vunpack.c.h.b16 %v223
    %v752 = vunpack.c.l.b16 %v224
    %v753 = vunpack.c.h.b16 %v224
    %v754 = vunpack.c.l.b16 %v225
    %v755 = vunpack.c.h.b16 %v225
    %v756 = vunpack.c.l.b16 %v226
    %v757 = vunpack.c.h.b16 %v226
    %v758 = vunpack.c.l.b16 %v227
    %v759 = vunpack.c.h.b16 %v227
    %v760 = vunpack.c.l.b16 %v228
    %v761 = vunpack.c.h.b16 %v228
    %v762 = vunpack.c.l.b16 %v229
    %v763 = vunpack.c.h.b16 %v229
    %v764 = vunpack.c.l.b16 %v230
    %v765 = vunpack.c.h.b16 %v230
    %v766 = vunpack.c.l.b16 %v231
    %v767 = vunpack.c.h.b16 %v231
    %v768 = vunpack.c.l.b16 %v232
    %v769 = vunpack.c.h.b16 %v232
    %v770 = vunpack.c.l.b16 %v233
    %v771 = vunpack.c.h.b16 %v233
    %v772 = vunpack.c.l.b16 %v234
    %v773 = vunpack.c.h.b16 %v234
    %v774 = vunpack.c.l.b16 %v235
    %v775 = vunpack.c.h.b16 %v235
    %v776 = vunpack.c.l.b16 %v236
    %v777 = vunpack.c.h.b16 %v236
    %v778 = vunpack.c.l.b16 %v237
    %v779 = vunpack.c.h.b16 %v237
    %v780 = vunpack.c.l.b16 %v238
    %v781 = vunpack.c.h.b16 %v238
    %v782 = vunpack.c.l.b16 %v239
    %v783 = vunpack.c.h.b16 %v239
    %v784 = vunpack.c.l.b16 %v240
    %v785 = vunpack.c.h.b16 %v240
    %v786 = vunpack.c.l.b16 %v241
    %v787 = vunpack.c.h.b16 %v241
    %v788 = vunpack.c.l.b16 %v242
    %v789 = vunpack.c.h.b16 %v242
    %v790 = vunpack.c.l.b16 %v243
    %v791 = vunpack.c.h.b16 %v243
    %v792 = vunpack.c.l.b16 %v244
    %v793 = vunpack.c.h.b16 %v244
    %v794 = vunpack.c.l.b16 %v245
    %v795 = vunpack.c.h.b16 %v245
    %v796 = vunpack.c.l.b16 %v246
    %v797 = vunpack.c.h.b16 %v246
    %v798 = vunpack.c.l.b16 %v247
    %v799 = vunpack.c.h.b16 %v247
    %v800 = vunpack.c.l.b16 %v248
    %v801 = vunpack.c.h.b16 %v248
    %v802 = vunpack.c.l.b16 %v249
    %v803 = vunpack.c.h.b16 %v249
    %v804 = vunpack.c.l.b16 %v250
    %v805 = vunpack.c.h.b16 %v250
    %v806 = vunpack.c.l.b16 %v251
    %v807 = vunpack.c.h.b16 %v251
    %v808 = vunpack.c.l.b16 %v252
    %v809 = vunpack.c.h.b16 %v252
    %v810 = vunpack.c.l.b16 %v253
    %v811 = vunpack.c.h.b16 %v253
    %v812 = vunpack.c.l.b16 %v254
    %v813 = vunpack.c.h.b16 %v254
    %v814 = vunpack.c.l.b16 %v255
    %v815 = vunpack.c.h.b16 %v255
    %v816 = vunpack.c.l.b16 %v256
    %v817 = vunpack.c.h.b16 %v256
    %v818 = vunpack.c.l.b16 %v257
    %v819 = vunpack.c.h.b16 %v257
    %v820 = vunpack.c.l.b16 %v258
    %v821 = vunpack.c.h.b16 %v258
    %v822 = vunpack.c.l.b16 %v259
    %v823 = vunpack.c.h.b16 %v259
    %v824 = vunpack.c.l.b16 %v260
    %v825 = vunpack.c.h.b16 %v260
    %v826 = vunpack.c.l.b16 %v261
    %v827 = vunpack.c.h.b16 %v261
    %v828 = vunpack.c.l.b16 %v262
    %v829 = vunpack.c.h.b16 %v262
    %v830 = vunpack.c.l.b16 %v263
    %v831 = vunpack.c.h.b16 %v263
    %v832 = vunpack.c.l.b16 %v264
    %v833 = vunpack.c.h.b16 %v264
    %v834 = vunpack.c.l.b16 %v265
    %v835 = vunpack.c.h.b16 %v265
    %v836 = vunpack.c.l.b16 %v266
    %v837 = vunpack.c.h.b16 %v266
    %v838 = vunpack.c.l.b16 %v267
    %v839 = vunpack.c.h.b16 %v267
    %v840 = vunpack.c.l.b16 %v268
    %v841 = vunpack.c.h.b16 %v268
    %v842 = vunpack.c.l.b16 %v269
    %v843 = vunpack.c.h.b16 %v269
    %v844 = vunpack.c.l.b16 %v270
    %v845 = vunpack.c.h.b16 %v270
    %v846 = vunpack.c.l.b16 %v271
    %v847 = vunpack.c.h.b16 %v271
    %v848 = vunpack.c.l.b16 %v272
    %v849 = vunpack.c.h.b16 %v272
    %v850 = vunpack.c.l.b16 %v273
    %v851 = vunpack.c.h.b16 %v273
    %v852 = vunpack.c.l.b16 %v274
    %v853 = vunpack.c.h.b16 %v274
    %v854 = vunpack.c.l.b16 %v275
    %v855 = vunpack.c.h.b16 %v275
    %v856 = vunpack.c.l.b16 %v276
    %v857 = vunpack.c.h.b16 %v276
    %v858 = vunpack.c.l.b16 %v277
    %v859 = vunpack.c.h.b16 %v277
    %v860 = vunpack.c.l.b16 %v278
    %v861 = vunpack.c.h.b16 %v278
    %v862 = vunpack.c.l.b16 %v279
    %v863 = vunpack.c.h.b16 %v279
    %v864 = vunpack.c.l.b16 %v280
    %v865 = vunpack.c.h.b16 %v280
    %v866 = vpack.c.b16 %v486, %v482
    %v867 = vpack.c.b16 %v487, %v483
    %v868 = vpack.c.b16 %v488, %v484
    %v869 = vpack.c.b16 %v489, %v485
    %v870 = vpack.c.b16 %v494, %v490
    %v871 = vpack.c.b16 %v495, %v491
    %v872 = vpack.c.b16 %v496, %v492
    %v873 = vpack.c.b16 %v497, %v493
    %v874 = vpack.c.b16 %v502, %v498
    %v875 = vpack.c.b16 %v503, %v499
    %v876 = vpack.c.b16 %v504, %v500
    %v877 = vpack.c.b16 %v505, %v501
    %v878 = vpack.c.b16 %v510, %v506
    %v879 = vpack.c.b16 %v511, %v507
    %v880 = vpack.c.b16 %v512, %v508
    %v881 = vpack.c.b16 %v513, %v509
    %v882 = vpack.c.b16 %v518, %v514
    %v883 = vpack.c.b16 %v519, %v515
    %v884 = vpack.c.b16 %v520, %v516
    %v885 = vpack.c.b16 %v521, %v517
    %v886 = vpack.c.b16 %v526, %v522
    %v887 = vpack.c.b16 %v527, %v523
    %v888 = vpack.c.b16 %v528, %v524
    %v889 = vpack.c.b16 %v529, %v525
    %v890 = vpack.c.b16 %v534, %v530
    %v891 = vpack.c.b16 %v535, %v531
    %v892 = vpack.c.b16 %v536, %v532
    %v893 = vpack.c.b16 %v537, %v533
    %v894 = vpack.c.b16 %v542, %v538
    %v895 = vpack.c.b16 %v543, %v539
    %v896 = vpack.c.b16 %v544, %v540
    %v897 = vpack.c.b16 %v545, %v541
    %v898 = vpack.c.b16 %v550, %v546
    %v899 = vpack.c.b16 %v551, %v547
    %v900 = vpack.c.b16 %v552, %v548
    %v901 = vpack.c.b16 %v553, %v549
    %v902 = vpack.c.b16 %v558, %v554
    %v903 = vpack.c.b16 %v559, %v555
    %v904 = vpack.c.b16 %v560, %v556
    %v905 = vpack.c.b16 %v561, %v557
    %v906 = vpack.c.b16 %v566, %v562
    %v907 = vpack.c.b16 %v567, %v563
    %v908 = vpack.c.b16 %v568, %v564
    %v909 = vpack.c.b16 %v569, %v565
    %v910 = vpack.c.b16 %v574, %v570
    %v911 = vpack.c.b16 %v575, %v571
    %v912 = vpack.c.b16 %v576, %v572
    %v913 = vpack.c.b16 %v577, %v573
    %v914 = vpack.c.b16 %v582, %v578
    %v915 = vpack.c.b16 %v583, %v579
    %v916 = vpack.c.b16 %v584, %v580
    %v917 = vpack.c.b16 %v585, %v581
    %v918 = vpack.c.b16 %v590, %v586
    %v919 = vpack.c.b16 %v591, %v587
    %v920 = vpack.c.b16 %v592, %v588
    %v921 = vpack.c.b16 %v593, %v589
    %v922 = vpack.c.b16 %v598, %v594
    %v923 = vpack.c.b16 %v599, %v595
    %v924 = vpack.c.b16 %v600, %v596
    %v925 = vpack.c.b16 %v601, %v597
    %v926 = vpack.c.b16 %v606, %v602
    %v927 = vpack.c.b16 %v607, %v603
    %v928 = vpack.c.b16 %v608, %v604
    %v929 = vpack.c.b16 %v609, %v605
    %v930 = vpack.c.b16 %v614, %v610
    %v931 = vpack.c.b16 %v615, %v611
    %v932 = vpack.c.b16 %v616, %v612
    %v933 = vpack.c.b16 %v617, %v613
    %v934 = vpack.c.b16 %v622, %v618
    %v935 = vpack.c.b16 %v623, %v619
    %v936 = vpack.c.b16 %v624, %v620
    %v937 = vpack.c.b16 %v625, %v621
    %v938 = vpack.c.b16 %v630, %v626
    %v939 = vpack.c.b16 %v631, %v627
    %v940 = vpack.c.b16 %v632, %v628
    %v941 = vpack.c.b16 %v633, %v629
    %v942 = vpack.c.b16 %v638, %v634
    %v943 = vpack.c.b16 %v639, %v635
    %v944 = vpack.c.b16 %v640, %v636
    %v945 = vpack.c.b16 %v641, %v637
    %v946 = vpack.c.b16 %v646, %v642
    %v947 = vpack.c.b16 %v647, %v643
    %v948 = vpack.c.b16 %v648, %v644
    %v949 = vpack.c.b16 %v649, %v645
    %v950 = vpack.c.b16 %v654, %v650
    %v951 = vpack.c.b16 %v655, %v651
    %v952 = vpack.c.b16 %v656, %v652
    %v953 = vpack.c.b16 %v657, %v653
    %v954 = vpack.c.b16 %v662, %v658
    %v955 = vpack.c.b16 %v663, %v659
    %v956 = vpack.c.b16 %v664, %v660
    %v957 = vpack.c.b16 %v665, %v661
    %v958 = vpack.c.b16 %v670, %v666
    %v959 = vpack.c.b16 %v671, %v667
    %v960 = vpack.c.b16 %v672, %v668
    %v961 = vpack.c.b16 %v673, %v669
    %v962 = vpack.c.b16 %v678, %v674
    %v963 = vpack.c.b16 %v679, %v675
    %v964 = vpack.c.b16 %v680, %v676
    %v965 = vpack.c.b16 %v681, %v677
    %v966 = vpack.c.b16 %v686, %v682
    %v967 = vpack.c.b16 %v687, %v683
    %v968 = vpack.c.b16 %v688, %v684
    %v969 = vpack.c.b16 %v689, %v685
    %v970 = vpack.c.b16 %v694, %v690
    %v971 = vpack.c.b16 %v695, %v691
    %v972 = vpack.c.b16 %v696, %v692
    %v973 = vpack.c.b16 %v697, %v693
    %v974 = vpack.c.b16 %v702, %v698
    %v975 = vpack.c.b16 %v703, %v699
    %v976 = vpack.c.b16 %v704, %v700
    %v977 = vpack.c.b16 %v705, %v701
    %v978 = vpack.c.b16 %v710, %v706
    %v979 = vpack.c.b16 %v711, %v707
    %v980 = vpack.c.b16 %v712, %v708
    %v981 = vpack.c.b16 %v713, %v709
    %v982 = vpack.c.b16 %v718, %v714
    %v983 = vpack.c.b16 %v719, %v715
    %v984 = vpack.c.b16 %v720, %v716
    %v985 = vpack.c.b16 %v721, %v717
    %v986 = vpack.c.b16 %v726, %v722
    %v987 = vpack.c.b16 %v727, %v723
    %v988 = vpack.c.b16 %v728, %v724
    %v989 = vpack.c.b16 %v729, %v725
    %v990 = vpack.c.b16 %v734, %v730
    %v991 = vpack.c.b16 %v735, %v731
    %v992 = vpack.c.b16 %v736, %v732
    %v993 = vpack.c.b16 %v737, %v733
    %v994 = vpack.c.b16 %v742, %v738
    %v995 = vpack.c.b16 %v743, %v739
    %v996 = vpack.c.b16 %v744, %v740
    %v997 = vpack.c.b16 %v745, %v741
    %v998 = vpack.c.b16 %v750, %v746
    %v999 = vpack.c.b16 %v751, %v747
    %v1000 = vpack.c.b16 %v752, %v748
    %v1001 = vpack.c.b16 %v753, %v749
    %v1002 = vpack.c.b16 %v758, %v754
    %v1003 = vpack.c.b16 %v759, %v755
    %v1004 = vpack.c.b16 %v760, %v756
    %v1005 = vpack.c.b16 %v761, %v757
    %v1006 = vpack.c.b16 %v766, %v762
    %v1007 = vpack.c.b16 %v767, %v763
    %v1008 = vpack.c.b16 %v768, %v764
    %v1009 = vpack.c.b16 %v769, %v765
    %v1010 = vpack.c.b16 %v774, %v770
    %v1011 = vpack.c.b16 %v775, %v771
    %v1012 = vpack.c.b16 %v776, %v772
    %v1013 = vpack.c.b16 %v777, %v773
    %v1014 = vpack.c.b16 %v782, %v778
    %v1015 = vpack.c.b16 %v783, %v779
    %v1016 = vpack.c.b16 %v784, %v780
    %v1017 = vpack.c.b16 %v785, %v781
    %v1018 = vpack.c.b16 %v790, %v786
    %v1019 = vpack.c.b16 %v791, %v787
    %v1020 = vpack.c.b16 %v792, %v788
    %v1021 = vpack.c.b16 %v793, %v789
    %v1022 = vpack.c.b16 %v798, %v794
    %v1023 = vpack.c.b16 %v799, %v795
    %v1024 = vpack.c.b16 %v800, %v796
    %v1025 = vpack.c.b16 %v801, %v797
    %v1026 = vpack.c.b16 %v806, %v802
    %v1027 = vpack.c.b16 %v807, %v803
    %v1028 = vpack.c.b16 %v808, %v804
    %v1029 = vpack.c.b16 %v809, %v805
    %v1030 = vpack.c.b16 %v814, %v810
    %v1031 = vpack.c.b16 %v815, %v811
    %v1032 = vpack.c.b16 %v816, %v812
    %v1033 = vpack.c.b16 %v817, %v813
    %v1034 = vpack.c.b16 %v822, %v818
    %v1035 = vpack.c.b16 %v823, %v819
    %v1036 = vpack.c.b16 %v824, %v820
    %v1037 = vpack.c.b16 %v825, %v821
    %v1038 = vpack.c.b16 %v830, %v826
    %v1039 = vpack.c.b16 %v831, %v827
    %v1040 = vpack.c.b16 %v832, %v828
    %v1041 = vpack.c.b16 %v833, %v829
    %v1042 = vpack.c.b16 %v838, %v834
    %v1043 = vpack.c.b16 %v839, %v835
    %v1044 = vpack.c.b16 %v840, %v836
    %v1045 = vpack.c.b16 %v841, %v837
    %v1046 = vpack.c.b16 %v846, %v842
    %v1047 = vpack.c.b16 %v847, %v843
    %v1048 = vpack.c.b16 %v848, %v844
    %v1049 = vpack.c.b16 %v849, %v845
    %v1050 = vpack.c.b16 %v854, %v850
    %v1051 = vpack.c.b16 %v855, %v851
    %v1052 = vpack.c.b16 %v856, %v852
    %v1053 = vpack.c.b16 %v857, %v853
    %v1054 = vpack.c.b16 %v862, %v858
    %v1055 = vpack.c.b16 %v863, %v859
    %v1056 = vpack.c.b16 %v864, %v860
    %v1057 = vpack.c.b16 %v865, %v861
    %1250 = vmatpush.bf16.msra.mxu0 %v894
    %1251 = vmatpush.bf16.msra.mxu0 %v890
    %1252 = vmatpush.bf16.msra.mxu0 %v886
    %1253 = vmatpush.bf16.msra.mxu0 %v882
    %1254 = vmatpush.bf16.msra.mxu0 %v878
    %1255 = vmatpush.bf16.msra.mxu0 %v874
    %1256 = vmatpush.bf16.msra.mxu0 %v870
    %1257 = vmatpush.bf16.msra.mxu0 %v866
    %1258 = vmatmul.bf16.gmra.mxu0 %v79
    %v1259 = vpop.f32.mrf.mxu0
    %v1260 = vadd.f32 %v282, %v1259
    %v1261 = vpop.f32.mrf.mxu0
    %v1262 = vadd.f32 %v282, %v1261
    %1263 = vdwg.mxu0
    %1264 = vmatpush.bf16.msra.mxu0 %v926
    %1265 = vmatpush.bf16.msra.mxu0 %v922
    %1266 = vmatpush.bf16.msra.mxu0 %v918
    %1267 = vmatpush.bf16.msra.mxu0 %v914
    %1268 = vmatpush.bf16.msra.mxu0 %v910
    %1269 = vmatpush.bf16.msra.mxu0 %v906
    %1270 = vmatpush.bf16.msra.mxu0 %v902
    %1271 = vmatpush.bf16.msra.mxu0 %v898
    %1272 = vmatmul.bf16.gmra.mxu0 %v80
    %v1273 = vpop.f32.mrf.mxu0
    %v1274 = vadd.f32 %v1260, %v1273
    %v1275 = vpop.f32.mrf.mxu0
    %v1276 = vadd.f32 %v1262, %v1275
    %1277 = vdwg.mxu0
    %1278 = vmatpush.bf16.msra.mxu0 %v958
    %1279 = vmatpush.bf16.msra.mxu0 %v954
    %1280 = vmatpush.bf16.msra.mxu0 %v950
    %1281 = vmatpush.bf16.msra.mxu0 %v946
    %1282 = vmatpush.bf16.msra.mxu0 %v942
    %1283 = vmatpush.bf16.msra.mxu0 %v938
    %1284 = vmatpush.bf16.msra.mxu0 %v934
    %1285 = vmatpush.bf16.msra.mxu0 %v930
    %1286 = vmatmul.bf16.gmra.mxu0 %v81
    %v1287 = vpop.f32.mrf.mxu0
    %v1288 = vadd.f32 %v1274, %v1287
    %v1289 = vpop.f32.mrf.mxu0
    %v1290 = vadd.f32 %v1276, %v1289
    %1291 = vdwg.mxu0
    %1292 = vmatpush.bf16.msra.mxu0 %v990
    %1293 = vmatpush.bf16.msra.mxu0 %v986
    %1294 = vmatpush.bf16.msra.mxu0 %v982
    %1295 = vmatpush.bf16.msra.mxu0 %v978
    %1296 = vmatpush.bf16.msra.mxu0 %v974
    %1297 = vmatpush.bf16.msra.mxu0 %v970
    %1298 = vmatpush.bf16.msra.mxu0 %v966
    %1299 = vmatpush.bf16.msra.mxu0 %v962
    %1300 = vmatmul.bf16.gmra.mxu0 %v82
    %v1301 = vpop.f32.mrf.mxu0
    %v1302 = vadd.f32 %v1288, %v1301
    %v1303 = vpop.f32.mrf.mxu0
    %v1304 = vadd.f32 %v1290, %v1303
    %1305 = vdwg.mxu0
    %1306 = vmatpush.bf16.msra.mxu0 %v1022
    %1307 = vmatpush.bf16.msra.mxu0 %v1018
    %1308 = vmatpush.bf16.msra.mxu0 %v1014
    %1309 = vmatpush.bf16.msra.mxu0 %v1010
    %1310 = vmatpush.bf16.msra.mxu0 %v1006
    %1311 = vmatpush.bf16.msra.mxu0 %v1002
    %1312 = vmatpush.bf16.msra.mxu0 %v998
    %1313 = vmatpush.bf16.msra.mxu0 %v994
    %1314 = vmatmul.bf16.gmra.mxu0 %v83
    %v1315 = vpop.f32.mrf.mxu0
    %v1316 = vadd.f32 %v1302, %v1315
    %v1317 = vpop.f32.mrf.mxu0
    %v1318 = vadd.f32 %v1304, %v1317
    %1319 = vdwg.mxu0
    %1320 = vmatpush.bf16.msra.mxu0 %v1054
    %1321 = vmatpush.bf16.msra.mxu0 %v1050
    %1322 = vmatpush.bf16.msra.mxu0 %v1046
    %1323 = vmatpush.bf16.msra.mxu0 %v1042
    %1324 = vmatpush.bf16.msra.mxu0 %v1038
    %1325 = vmatpush.bf16.msra.mxu0 %v1034
    %1326 = vmatpush.bf16.msra.mxu0 %v1030
    %1327 = vmatpush.bf16.msra.mxu0 %v1026
    %1328 = vmatmul.bf16.gmra.mxu0 %v84
    %v1329 = vpop.f32.mrf.mxu0
    %v1330 = vadd.f32 %v1316, %v1329
    %v1331 = vpop.f32.mrf.mxu0
    %v1332 = vadd.f32 %v1318, %v1331
    %1333 = vdwg.mxu0
    %1334 = vmatpush.bf16.msra.mxu0 %v895
    %1335 = vmatpush.bf16.msra.mxu0 %v891
    %1336 = vmatpush.bf16.msra.mxu0 %v887
    %1337 = vmatpush.bf16.msra.mxu0 %v883
    %1338 = vmatpush.bf16.msra.mxu0 %v879
    %1339 = vmatpush.bf16.msra.mxu0 %v875
    %1340 = vmatpush.bf16.msra.mxu0 %v871
    %1341 = vmatpush.bf16.msra.mxu0 %v867
    %1342 = vmatmul.bf16.gmra.mxu0 %v79
    %v1343 = vpop.f32.mrf.mxu0
    %v1344 = vadd.f32 %v283, %v1343
    %v1345 = vpop.f32.mrf.mxu0
    %v1346 = vadd.f32 %v283, %v1345
    %1347 = vdwg.mxu0
    %1348 = vmatpush.bf16.msra.mxu0 %v927
    %1349 = vmatpush.bf16.msra.mxu0 %v923
    %1350 = vmatpush.bf16.msra.mxu0 %v919
    %1351 = vmatpush.bf16.msra.mxu0 %v915
    %1352 = vmatpush.bf16.msra.mxu0 %v911
    %1353 = vmatpush.bf16.msra.mxu0 %v907
    %1354 = vmatpush.bf16.msra.mxu0 %v903
    %1355 = vmatpush.bf16.msra.mxu0 %v899
    %1356 = vmatmul.bf16.gmra.mxu0 %v80
    %v1357 = vpop.f32.mrf.mxu0
    %v1358 = vadd.f32 %v1344, %v1357
    %v1359 = vpop.f32.mrf.mxu0
    %v1360 = vadd.f32 %v1346, %v1359
    %1361 = vdwg.mxu0
    %1362 = vmatpush.bf16.msra.mxu0 %v959
    %1363 = vmatpush.bf16.msra.mxu0 %v955
    %1364 = vmatpush.bf16.msra.mxu0 %v951
    %1365 = vmatpush.bf16.msra.mxu0 %v947
    %1366 = vmatpush.bf16.msra.mxu0 %v943
    %1367 = vmatpush.bf16.msra.mxu0 %v939
    %1368 = vmatpush.bf16.msra.mxu0 %v935
    %1369 = vmatpush.bf16.msra.mxu0 %v931
    %1370 = vmatmul.bf16.gmra.mxu0 %v81
    %v1371 = vpop.f32.mrf.mxu0
    %v1372 = vadd.f32 %v1358, %v1371
    %v1373 = vpop.f32.mrf.mxu0
    %v1374 = vadd.f32 %v1360, %v1373
    %1375 = vdwg.mxu0
    %1376 = vmatpush.bf16.msra.mxu0 %v991
    %1377 = vmatpush.bf16.msra.mxu0 %v987
    %1378 = vmatpush.bf16.msra.mxu0 %v983
    %1379 = vmatpush.bf16.msra.mxu0 %v979
    %1380 = vmatpush.bf16.msra.mxu0 %v975
    %1381 = vmatpush.bf16.msra.mxu0 %v971
    %1382 = vmatpush.bf16.msra.mxu0 %v967
    %1383 = vmatpush.bf16.msra.mxu0 %v963
    %1384 = vmatmul.bf16.gmra.mxu0 %v82
    %v1385 = vpop.f32.mrf.mxu0
    %v1386 = vadd.f32 %v1372, %v1385
    %v1387 = vpop.f32.mrf.mxu0
    %v1388 = vadd.f32 %v1374, %v1387
    %1389 = vdwg.mxu0
    %1390 = vmatpush.bf16.msra.mxu0 %v1023
    %1391 = vmatpush.bf16.msra.mxu0 %v1019
    %1392 = vmatpush.bf16.msra.mxu0 %v1015
    %1393 = vmatpush.bf16.msra.mxu0 %v1011
    %1394 = vmatpush.bf16.msra.mxu0 %v1007
    %1395 = vmatpush.bf16.msra.mxu0 %v1003
    %1396 = vmatpush.bf16.msra.mxu0 %v999
    %1397 = vmatpush.bf16.msra.mxu0 %v995
    %1398 = vmatmul.bf16.gmra.mxu0 %v83
    %v1399 = vpop.f32.mrf.mxu0
    %v1400 = vadd.f32 %v1386, %v1399
    %v1401 = vpop.f32.mrf.mxu0
    %v1402 = vadd.f32 %v1388, %v1401
    %1403 = vdwg.mxu0
    %1404 = vmatpush.bf16.msra.mxu0 %v1055
    %1405 = vmatpush.bf16.msra.mxu0 %v1051
    %1406 = vmatpush.bf16.msra.mxu0 %v1047
    %1407 = vmatpush.bf16.msra.mxu0 %v1043
    %1408 = vmatpush.bf16.msra.mxu0 %v1039
    %1409 = vmatpush.bf16.msra.mxu0 %v1035
    %1410 = vmatpush.bf16.msra.mxu0 %v1031
    %1411 = vmatpush.bf16.msra.mxu0 %v1027
    %1412 = vmatmul.bf16.gmra.mxu0 %v84
    %v1413 = vpop.f32.mrf.mxu0
    %v1414 = vadd.f32 %v1400, %v1413
    %v1415 = vpop.f32.mrf.mxu0
    %v1416 = vadd.f32 %v1402, %v1415
    %1417 = vdwg.mxu0
    %1418 = vmatpush.bf16.msra.mxu0 %v896
    %1419 = vmatpush.bf16.msra.mxu0 %v892
    %1420 = vmatpush.bf16.msra.mxu0 %v888
    %1421 = vmatpush.bf16.msra.mxu0 %v884
    %1422 = vmatpush.bf16.msra.mxu0 %v880
    %1423 = vmatpush.bf16.msra.mxu0 %v876
    %1424 = vmatpush.bf16.msra.mxu0 %v872
    %1425 = vmatpush.bf16.msra.mxu0 %v868
    %1426 = vmatmul.bf16.gmra.mxu0 %v79
    %v1427 = vpop.f32.mrf.mxu0
    %v1428 = vadd.f32 %v284, %v1427
    %v1429 = vpop.f32.mrf.mxu0
    %v1430 = vadd.f32 %v284, %v1429
    %1431 = vdwg.mxu0
    %1432 = vmatpush.bf16.msra.mxu0 %v928
    %1433 = vmatpush.bf16.msra.mxu0 %v924
    %1434 = vmatpush.bf16.msra.mxu0 %v920
    %1435 = vmatpush.bf16.msra.mxu0 %v916
    %1436 = vmatpush.bf16.msra.mxu0 %v912
    %1437 = vmatpush.bf16.msra.mxu0 %v908
    %1438 = vmatpush.bf16.msra.mxu0 %v904
    %1439 = vmatpush.bf16.msra.mxu0 %v900
    %1440 = vmatmul.bf16.gmra.mxu0 %v80
    %v1441 = vpop.f32.mrf.mxu0
    %v1442 = vadd.f32 %v1428, %v1441
    %v1443 = vpop.f32.mrf.mxu0
    %v1444 = vadd.f32 %v1430, %v1443
    %1445 = vdwg.mxu0
    %1446 = vmatpush.bf16.msra.mxu0 %v960
    %1447 = vmatpush.bf16.msra.mxu0 %v956
    %1448 = vmatpush.bf16.msra.mxu0 %v952
    %1449 = vmatpush.bf16.msra.mxu0 %v948
    %1450 = vmatpush.bf16.msra.mxu0 %v944
    %1451 = vmatpush.bf16.msra.mxu0 %v940
    %1452 = vmatpush.bf16.msra.mxu0 %v936
    %1453 = vmatpush.bf16.msra.mxu0 %v932
    %1454 = vmatmul.bf16.gmra.mxu0 %v81
    %v1455 = vpop.f32.mrf.mxu0
    %v1456 = vadd.f32 %v1442, %v1455
    %v1457 = vpop.f32.mrf.mxu0
    %v1458 = vadd.f32 %v1444, %v1457
    %1459 = vdwg.mxu0
    %1460 = vmatpush.bf16.msra.mxu0 %v992
    %1461 = vmatpush.bf16.msra.mxu0 %v988
    %1462 = vmatpush.bf16.msra.mxu0 %v984
    %1463 = vmatpush.bf16.msra.mxu0 %v980
    %1464 = vmatpush.bf16.msra.mxu0 %v976
    %1465 = vmatpush.bf16.msra.mxu0 %v972
    %1466 = vmatpush.bf16.msra.mxu0 %v968
    %1467 = vmatpush.bf16.msra.mxu0 %v964
    %1468 = vmatmul.bf16.gmra.mxu0 %v82
    %v1469 = vpop.f32.mrf.mxu0
    %v1470 = vadd.f32 %v1456, %v1469
    %v1471 = vpop.f32.mrf.mxu0
    %v1472 = vadd.f32 %v1458, %v1471
    %1473 = vdwg.mxu0
    %1474 = vmatpush.bf16.msra.mxu0 %v1024
    %1475 = vmatpush.bf16.msra.mxu0 %v1020
    %1476 = vmatpush.bf16.msra.mxu0 %v1016
    %1477 = vmatpush.bf16.msra.mxu0 %v1012
    %1478 = vmatpush.bf16.msra.mxu0 %v1008
    %1479 = vmatpush.bf16.msra.mxu0 %v1004
    %1480 = vmatpush.bf16.msra.mxu0 %v1000
    %1481 = vmatpush.bf16.msra.mxu0 %v996
    %1482 = vmatmul.bf16.gmra.mxu0 %v83
    %v1483 = vpop.f32.mrf.mxu0
    %v1484 = vadd.f32 %v1470, %v1483
    %v1485 = vpop.f32.mrf.mxu0
    %v1486 = vadd.f32 %v1472, %v1485
    %1487 = vdwg.mxu0
    %1488 = vmatpush.bf16.msra.mxu0 %v1056
    %1489 = vmatpush.bf16.msra.mxu0 %v1052
    %1490 = vmatpush.bf16.msra.mxu0 %v1048
    %1491 = vmatpush.bf16.msra.mxu0 %v1044
    %1492 = vmatpush.bf16.msra.mxu0 %v1040
    %1493 = vmatpush.bf16.msra.mxu0 %v1036
    %1494 = vmatpush.bf16.msra.mxu0 %v1032
    %1495 = vmatpush.bf16.msra.mxu0 %v1028
    %1496 = vmatmul.bf16.gmra.mxu0 %v84
    %v1497 = vpop.f32.mrf.mxu0
    %v1498 = vadd.f32 %v1484, %v1497
    %v1499 = vpop.f32.mrf.mxu0
    %v1500 = vadd.f32 %v1486, %v1499
    %1501 = vdwg.mxu0
    %1502 = vmatpush.bf16.msra.mxu0 %v897
    %1503 = vmatpush.bf16.msra.mxu0 %v893
    %1504 = vmatpush.bf16.msra.mxu0 %v889
    %1505 = vmatpush.bf16.msra.mxu0 %v885
    %1506 = vmatpush.bf16.msra.mxu0 %v881
    %1507 = vmatpush.bf16.msra.mxu0 %v877
    %1508 = vmatpush.bf16.msra.mxu0 %v873
    %1509 = vmatpush.bf16.msra.mxu0 %v869
    %1510 = vmatmul.bf16.gmra.mxu0 %v79
    %v1511 = vpop.f32.mrf.mxu0
    %v1512 = vadd.f32 %v285, %v1511
    %v1513 = vpop.f32.mrf.mxu0
    %v1514 = vadd.f32 %v285, %v1513
    %1515 = vdwg.mxu0
    %1516 = vmatpush.bf16.msra.mxu0 %v929
    %1517 = vmatpush.bf16.msra.mxu0 %v925
    %1518 = vmatpush.bf16.msra.mxu0 %v921
    %1519 = vmatpush.bf16.msra.mxu0 %v917
    %1520 = vmatpush.bf16.msra.mxu0 %v913
    %1521 = vmatpush.bf16.msra.mxu0 %v909
    %1522 = vmatpush.bf16.msra.mxu0 %v905
    %1523 = vmatpush.bf16.msra.mxu0 %v901
    %1524 = vmatmul.bf16.gmra.mxu0 %v80
    %v1525 = vpop.f32.mrf.mxu0
    %v1526 = vadd.f32 %v1512, %v1525
    %v1527 = vpop.f32.mrf.mxu0
    %v1528 = vadd.f32 %v1514, %v1527
    %1529 = vdwg.mxu0
    %1530 = vmatpush.bf16.msra.mxu0 %v961
    %1531 = vmatpush.bf16.msra.mxu0 %v957
    %1532 = vmatpush.bf16.msra.mxu0 %v953
    %1533 = vmatpush.bf16.msra.mxu0 %v949
    %1534 = vmatpush.bf16.msra.mxu0 %v945
    %1535 = vmatpush.bf16.msra.mxu0 %v941
    %1536 = vmatpush.bf16.msra.mxu0 %v937
    %1537 = vmatpush.bf16.msra.mxu0 %v933
    %1538 = vmatmul.bf16.gmra.mxu0 %v81
    %v1539 = vpop.f32.mrf.mxu0
    %v1540 = vadd.f32 %v1526, %v1539
    %v1541 = vpop.f32.mrf.mxu0
    %v1542 = vadd.f32 %v1528, %v1541
    %1543 = vdwg.mxu0
    %1544 = vmatpush.bf16.msra.mxu0 %v993
    %1545 = vmatpush.bf16.msra.mxu0 %v989
    %1546 = vmatpush.bf16.msra.mxu0 %v985
    %1547 = vmatpush.bf16.msra.mxu0 %v981
    %1548 = vmatpush.bf16.msra.mxu0 %v977
    %1549 = vmatpush.bf16.msra.mxu0 %v973
    %1550 = vmatpush.bf16.msra.mxu0 %v969
    %1551 = vmatpush.bf16.msra.mxu0 %v965
    %1552 = vmatmul.bf16.gmra.mxu0 %v82
    %v1553 = vpop.f32.mrf.mxu0
    %v1554 = vadd.f32 %v1540, %v1553
    %v1555 = vpop.f32.mrf.mxu0
    %v1556 = vadd.f32 %v1542, %v1555
    %1557 = vdwg.mxu0
    %1558 = vmatpush.bf16.msra.mxu0 %v1025
    %1559 = vmatpush.bf16.msra.mxu0 %v1021
    %1560 = vmatpush.bf16.msra.mxu0 %v1017
    %1561 = vmatpush.bf16.msra.mxu0 %v1013
    %1562 = vmatpush.bf16.msra.mxu0 %v1009
    %1563 = vmatpush.bf16.msra.mxu0 %v1005
    %1564 = vmatpush.bf16.msra.mxu0 %v1001
    %1565 = vmatpush.bf16.msra.mxu0 %v997
    %1566 = vmatmul.bf16.gmra.mxu0 %v83
    %v1567 = vpop.f32.mrf.mxu0
    %v1568 = vadd.f32 %v1554, %v1567
    %v1569 = vpop.f32.mrf.mxu0
    %v1570 = vadd.f32 %v1556, %v1569
    %1571 = vdwg.mxu0
    %1572 = vmatpush.bf16.msra.mxu0 %v1057
    %1573 = vmatpush.bf16.msra.mxu0 %v1053
    %1574 = vmatpush.bf16.msra.mxu0 %v1049
    %1575 = vmatpush.bf16.msra.mxu0 %v1045
    %1576 = vmatpush.bf16.msra.mxu0 %v1041
    %1577 = vmatpush.bf16.msra.mxu0 %v1037
    %1578 = vmatpush.bf16.msra.mxu0 %v1033
    %1579 = vmatpush.bf16.msra.mxu0 %v1029
    %1580 = vmatmul.bf16.gmra.mxu0 %v84
    %v1581 = vpop.f32.mrf.mxu0
    %v1582 = vadd.f32 %v1568, %v1581
    %v1583 = vpop.f32.mrf.mxu0
    %v1584 = vadd.f32 %v1570, %v1583
    %1585 = vdwg.mxu0
    %v1586 = vmax.f32 %v1330, 0.0
    %v1587 = vmax.f32 %v1414, 0.0
    %v1588 = vmax.f32 %v1498, 0.0
    %v1589 = vmax.f32 %v1582, 0.0
    %v1590 = vmax.f32 %v1332, 0.0
    %v1591 = vmax.f32 %v1416, 0.0
    %v1592 = vmax.f32 %v1500, 0.0
    %v1593 = vmax.f32 %v1584, 0.0
    %v1594 = vpack.c.bf16 %v1590, %v1586
    %v1595 = vpack.c.bf16 %v1591, %v1587
    %v1596 = vpack.c.bf16 %v1592, %v1588
    %v1597 = vpack.c.bf16 %v1593, %v1589
    %v1598 = vld [vmem:[#allocation4] sm:$0xff]
    %v1599 = vld [vmem:[#allocation4 + $0x8] sm:$0xff]
    %v1600 = vld [vmem:[#allocation4 + $0x10] sm:$0xff]
    %v1601 = vld [vmem:[#allocation4 + $0x18] sm:$0xff]
    %v1602 = vld [vmem:[#allocation4 + $0x20] sm:$0xff]
    %v1603 = vld [vmem:[#allocation4 + $0x28] sm:$0xff]
    %v1604 = vld [vmem:[#allocation4 + $0x30] sm:$0xff]
    %v1605 = vld [vmem:[#allocation4 + $0x38] sm:$0xff]
    %v1606 = vld [vmem:[#allocation4 + $0x40] sm:$0xff]
    %v1607 = vld [vmem:[#allocation4 + $0x48] sm:$0xff]
    %v1608 = vld [vmem:[#allocation4 + $0x50] sm:$0xff]
    %v1609 = vld [vmem:[#allocation4 + $0x58] sm:$0xff]
    %v1610 = vld [vmem:[#allocation4 + $0x60] sm:$0xff]
    %v1611 = vld [vmem:[#allocation4 + $0x68] sm:$0xff]
    %v1612 = vld [vmem:[#allocation4 + $0x70] sm:$0xff]
    %v1613 = vld [vmem:[#allocation4 + $0x78] sm:$0xff]
    %v1614 = vld [vmem:[#allocation4 + $0x80] sm:$0xff]
    %v1615 = vld [vmem:[#allocation4 + $0x88] sm:$0xff]
    %v1616 = vld [vmem:[#allocation4 + $0x90] sm:$0xff]
    %v1617 = vld [vmem:[#allocation4 + $0x98] sm:$0xff]
    %v1618 = vld [vmem:[#allocation4 + $0xa0] sm:$0xff]
    %v1619 = vld [vmem:[#allocation4 + $0xa8] sm:$0xff]
    %v1620 = vld [vmem:[#allocation4 + $0xb0] sm:$0xff]
    %v1621 = vld [vmem:[#allocation4 + $0xb8] sm:$0xff]
    %v1622 = vld [vmem:[#allocation4 + $0xc0] sm:$0xff]
    %v1623 = vld [vmem:[#allocation4 + $0xc8] sm:$0xff]
    %v1624 = vld [vmem:[#allocation4 + $0xd0] sm:$0xff]
    %v1625 = vld [vmem:[#allocation4 + $0xd8] sm:$0xff]
    %v1626 = vld [vmem:[#allocation4 + $0xe0] sm:$0xff]
    %v1627 = vld [vmem:[#allocation4 + $0xe8] sm:$0xff]
    %v1628 = vld [vmem:[#allocation4 + $0xf0] sm:$0xff]
    %v1629 = vld [vmem:[#allocation4 + $0xf8] sm:$0xff]
    %v1630 = vld [vmem:[#allocation4 + $0x100] sm:$0xff]
    %v1631 = vld [vmem:[#allocation4 + $0x108] sm:$0xff]
    %v1632 = vld [vmem:[#allocation4 + $0x110] sm:$0xff]
    %v1633 = vld [vmem:[#allocation4 + $0x118] sm:$0xff]
    %v1634 = vld [vmem:[#allocation4 + $0x120] sm:$0xff]
    %v1635 = vld [vmem:[#allocation4 + $0x128] sm:$0xff]
    %v1636 = vld [vmem:[#allocation4 + $0x130] sm:$0xff]
    %v1637 = vld [vmem:[#allocation4 + $0x138] sm:$0xff]
    %v1638 = vld [vmem:[#allocation4 + $0x140] sm:$0xff]
    %v1639 = vld [vmem:[#allocation4 + $0x148] sm:$0xff]
    %v1640 = vld [vmem:[#allocation4 + $0x150] sm:$0xff]
    %v1641 = vld [vmem:[#allocation4 + $0x158] sm:$0xff]
    %v1642 = vld [vmem:[#allocation4 + $0x160] sm:$0xff]
    %v1643 = vld [vmem:[#allocation4 + $0x168] sm:$0xff]
    %v1644 = vld [vmem:[#allocation4 + $0x170] sm:$0xff]
    %v1645 = vld [vmem:[#allocation4 + $0x178] sm:$0xff]
    %v1646 = vld [vmem:[#allocation4 + $0x180] sm:$0xff]
    %v1647 = vld [vmem:[#allocation4 + $0x188] sm:$0xff]
    %v1648 = vld [vmem:[#allocation4 + $0x190] sm:$0xff]
    %v1649 = vld [vmem:[#allocation4 + $0x198] sm:$0xff]
    %v1650 = vld [vmem:[#allocation4 + $0x1a0] sm:$0xff]
    %v1651 = vld [vmem:[#allocation4 + $0x1a8] sm:$0xff]
    %v1652 = vld [vmem:[#allocation4 + $0x1b0] sm:$0xff]
    %v1653 = vld [vmem:[#allocation4 + $0x1b8] sm:$0xff]
    %v1654 = vld [vmem:[#allocation4 + $0x1c0] sm:$0xff]
    %v1655 = vld [vmem:[#allocation4 + $0x1c8] sm:$0xff]
    %v1656 = vld [vmem:[#allocation4 + $0x1d0] sm:$0xff]
    %v1657 = vld [vmem:[#allocation4 + $0x1d8] sm:$0xff]
    %v1658 = vld [vmem:[#allocation4 + $0x1e0] sm:$0xff]
    %v1659 = vld [vmem:[#allocation4 + $0x1e8] sm:$0xff]
    %v1660 = vld [vmem:[#allocation4 + $0x1f0] sm:$0xff]
    %v1661 = vld [vmem:[#allocation4 + $0x1f8] sm:$0xff]
    %v1662 = vld [vmem:[#allocation4 + $0x200] sm:$0xff]
    %v1663 = vld [vmem:[#allocation4 + $0x208] sm:$0xff]
    %v1664 = vld [vmem:[#allocation4 + $0x210] sm:$0xff]
    %v1665 = vld [vmem:[#allocation4 + $0x218] sm:$0xff]
    %v1666 = vld [vmem:[#allocation4 + $0x220] sm:$0xff]
    %v1667 = vld [vmem:[#allocation4 + $0x228] sm:$0xff]
    %v1668 = vld [vmem:[#allocation4 + $0x230] sm:$0xff]
    %v1669 = vld [vmem:[#allocation4 + $0x238] sm:$0xff]
    %v1670 = vld [vmem:[#allocation4 + $0x240] sm:$0xff]
    %v1671 = vld [vmem:[#allocation4 + $0x248] sm:$0xff]
    %v1672 = vld [vmem:[#allocation4 + $0x250] sm:$0xff]
    %v1673 = vld [vmem:[#allocation4 + $0x258] sm:$0xff]
    %v1674 = vld [vmem:[#allocation4 + $0x260] sm:$0xff]
    %v1675 = vld [vmem:[#allocation4 + $0x268] sm:$0xff]
    %v1676 = vld [vmem:[#allocation4 + $0x270] sm:$0xff]
    %v1677 = vld [vmem:[#allocation4 + $0x278] sm:$0xff]
    %v1678 = vld [vmem:[#allocation4 + $0x280] sm:$0xff]
    %v1679 = vld [vmem:[#allocation4 + $0x288] sm:$0xff]
    %v1680 = vld [vmem:[#allocation4 + $0x290] sm:$0xff]
    %v1681 = vld [vmem:[#allocation4 + $0x298] sm:$0xff]
    %v1682 = vld [vmem:[#allocation4 + $0x2a0] sm:$0xff]
    %v1683 = vld [vmem:[#allocation4 + $0x2a8] sm:$0xff]
    %v1684 = vld [vmem:[#allocation4 + $0x2b0] sm:$0xff]
    %v1685 = vld [vmem:[#allocation4 + $0x2b8] sm:$0xff]
    %v1686 = vld [vmem:[#allocation4 + $0x2c0] sm:$0xff]
    %v1687 = vld [vmem:[#allocation4 + $0x2c8] sm:$0xff]
    %v1688 = vld [vmem:[#allocation4 + $0x2d0] sm:$0xff]
    %v1689 = vld [vmem:[#allocation4 + $0x2d8] sm:$0xff]
    %v1690 = vld [vmem:[#allocation4 + $0x2e0] sm:$0xff]
    %v1691 = vld [vmem:[#allocation4 + $0x2e8] sm:$0xff]
    %v1692 = vld [vmem:[#allocation4 + $0x2f0] sm:$0xff]
    %v1693 = vld [vmem:[#allocation4 + $0x2f8] sm:$0xff]
    %v1694 = vld [vmem:[#allocation4 + $0x300] sm:$0xff]
    %v1695 = vld [vmem:[#allocation4 + $0x308] sm:$0xff]
    %v1696 = vld [vmem:[#allocation4 + $0x310] sm:$0xff]
    %v1697 = vld [vmem:[#allocation4 + $0x318] sm:$0xff]
    %v1698 = vld [vmem:[#allocation4 + $0x320] sm:$0xff]
    %v1699 = vld [vmem:[#allocation4 + $0x328] sm:$0xff]
    %v1700 = vld [vmem:[#allocation4 + $0x330] sm:$0xff]
    %v1701 = vld [vmem:[#allocation4 + $0x338] sm:$0xff]
    %v1702 = vld [vmem:[#allocation4 + $0x340] sm:$0xff]
    %v1703 = vld [vmem:[#allocation4 + $0x348] sm:$0xff]
    %v1704 = vld [vmem:[#allocation4 + $0x350] sm:$0xff]
    %v1705 = vld [vmem:[#allocation4 + $0x358] sm:$0xff]
    %v1706 = vld [vmem:[#allocation4 + $0x360] sm:$0xff]
    %v1707 = vld [vmem:[#allocation4 + $0x368] sm:$0xff]
    %v1708 = vld [vmem:[#allocation4 + $0x370] sm:$0xff]
    %v1709 = vld [vmem:[#allocation4 + $0x378] sm:$0xff]
    %v1710 = vld [vmem:[#allocation4 + $0x380] sm:$0xff]
    %v1711 = vld [vmem:[#allocation4 + $0x388] sm:$0xff]
    %v1712 = vld [vmem:[#allocation4 + $0x390] sm:$0xff]
    %v1713 = vld [vmem:[#allocation4 + $0x398] sm:$0xff]
    %v1714 = vld [vmem:[#allocation4 + $0x3a0] sm:$0xff]
    %v1715 = vld [vmem:[#allocation4 + $0x3a8] sm:$0xff]
    %v1716 = vld [vmem:[#allocation4 + $0x3b0] sm:$0xff]
    %v1717 = vld [vmem:[#allocation4 + $0x3b8] sm:$0xff]
    %v1718 = vld [vmem:[#allocation4 + $0x3c0] sm:$0xff]
    %v1719 = vld [vmem:[#allocation4 + $0x3c8] sm:$0xff]
    %v1720 = vld [vmem:[#allocation4 + $0x3d0] sm:$0xff]
    %v1721 = vld [vmem:[#allocation4 + $0x3d8] sm:$0xff]
    %v1722 = vld [vmem:[#allocation4 + $0x3e0] sm:$0xff]
    %v1723 = vld [vmem:[#allocation4 + $0x3e8] sm:$0xff]
    %v1724 = vld [vmem:[#allocation4 + $0x3f0] sm:$0xff]
    %v1725 = vld [vmem:[#allocation4 + $0x3f8] sm:$0xff]
    %v1727 = vperm.slane %v87, 0
    %v1728 = vperm.slane %v87, 1
    %v1729 = vperm.slane %v87, 2
    %v1730 = vperm.slane %v87, 3
    %v1863 = vunpack.c.l.b16 %v1598
    %v1864 = vunpack.c.h.b16 %v1598
    %v1865 = vunpack.c.l.b16 %v1599
    %v1866 = vunpack.c.h.b16 %v1599
    %v1867 = vunpack.c.l.b16 %v1600
    %v1868 = vunpack.c.h.b16 %v1600
    %v1869 = vunpack.c.l.b16 %v1601
    %v1870 = vunpack.c.h.b16 %v1601
    %v1871 = vunpack.c.l.b16 %v1602
    %v1872 = vunpack.c.h.b16 %v1602
    %v1873 = vunpack.c.l.b16 %v1603
    %v1874 = vunpack.c.h.b16 %v1603
    %v1875 = vunpack.c.l.b16 %v1604
    %v1876 = vunpack.c.h.b16 %v1604
    %v1877 = vunpack.c.l.b16 %v1605
    %v1878 = vunpack.c.h.b16 %v1605
    %v1879 = vunpack.c.l.b16 %v1606
    %v1880 = vunpack.c.h.b16 %v1606
    %v1881 = vunpack.c.l.b16 %v1607
    %v1882 = vunpack.c.h.b16 %v1607
    %v1883 = vunpack.c.l.b16 %v1608
    %v1884 = vunpack.c.h.b16 %v1608
    %v1885 = vunpack.c.l.b16 %v1609
    %v1886 = vunpack.c.h.b16 %v1609
    %v1887 = vunpack.c.l.b16 %v1610
    %v1888 = vunpack.c.h.b16 %v1610
    %v1889 = vunpack.c.l.b16 %v1611
    %v1890 = vunpack.c.h.b16 %v1611
    %v1891 = vunpack.c.l.b16 %v1612
    %v1892 = vunpack.c.h.b16 %v1612
    %v1893 = vunpack.c.l.b16 %v1613
    %v1894 = vunpack.c.h.b16 %v1613
    %v1895 = vunpack.c.l.b16 %v1614
    %v1896 = vunpack.c.h.b16 %v1614
    %v1897 = vunpack.c.l.b16 %v1615
    %v1898 = vunpack.c.h.b16 %v1615
    %v1899 = vunpack.c.l.b16 %v1616
    %v1900 = vunpack.c.h.b16 %v1616
    %v1901 = vunpack.c.l.b16 %v1617
    %v1902 = vunpack.c.h.b16 %v1617
    %v1903 = vunpack.c.l.b16 %v1618
    %v1904 = vunpack.c.h.b16 %v1618
    %v1905 = vunpack.c.l.b16 %v1619
    %v1906 = vunpack.c.h.b16 %v1619
    %v1907 = vunpack.c.l.b16 %v1620
    %v1908 = vunpack.c.h.b16 %v1620
    %v1909 = vunpack.c.l.b16 %v1621
    %v1910 = vunpack.c.h.b16 %v1621
    %v1911 = vunpack.c.l.b16 %v1622
    %v1912 = vunpack.c.h.b16 %v1622
    %v1913 = vunpack.c.l.b16 %v1623
    %v1914 = vunpack.c.h.b16 %v1623
    %v1915 = vunpack.c.l.b16 %v1624
    %v1916 = vunpack.c.h.b16 %v1624
    %v1917 = vunpack.c.l.b16 %v1625
    %v1918 = vunpack.c.h.b16 %v1625
    %v1919 = vunpack.c.l.b16 %v1626
    %v1920 = vunpack.c.h.b16 %v1626
    %v1921 = vunpack.c.l.b16 %v1627
    %v1922 = vunpack.c.h.b16 %v1627
    %v1923 = vunpack.c.l.b16 %v1628
    %v1924 = vunpack.c.h.b16 %v1628
    %v1925 = vunpack.c.l.b16 %v1629
    %v1926 = vunpack.c.h.b16 %v1629
    %v1927 = vunpack.c.l.b16 %v1630
    %v1928 = vunpack.c.h.b16 %v1630
    %v1929 = vunpack.c.l.b16 %v1631
    %v1930 = vunpack.c.h.b16 %v1631
    %v1931 = vunpack.c.l.b16 %v1632
    %v1932 = vunpack.c.h.b16 %v1632
    %v1933 = vunpack.c.l.b16 %v1633
    %v1934 = vunpack.c.h.b16 %v1633
    %v1935 = vunpack.c.l.b16 %v1634
    %v1936 = vunpack.c.h.b16 %v1634
    %v1937 = vunpack.c.l.b16 %v1635
    %v1938 = vunpack.c.h.b16 %v1635
    %v1939 = vunpack.c.l.b16 %v1636
    %v1940 = vunpack.c.h.b16 %v1636
    %v1941 = vunpack.c.l.b16 %v1637
    %v1942 = vunpack.c.h.b16 %v1637
    %v1943 = vunpack.c.l.b16 %v1638
    %v1944 = vunpack.c.h.b16 %v1638
    %v1945 = vunpack.c.l.b16 %v1639
    %v1946 = vunpack.c.h.b16 %v1639
    %v1947 = vunpack.c.l.b16 %v1640
    %v1948 = vunpack.c.h.b16 %v1640
    %v1949 = vunpack.c.l.b16 %v1641
    %v1950 = vunpack.c.h.b16 %v1641
    %v1951 = vunpack.c.l.b16 %v1642
    %v1952 = vunpack.c.h.b16 %v1642
    %v1953 = vunpack.c.l.b16 %v1643
    %v1954 = vunpack.c.h.b16 %v1643
    %v1955 = vunpack.c.l.b16 %v1644
    %v1956 = vunpack.c.h.b16 %v1644
    %v1957 = vunpack.c.l.b16 %v1645
    %v1958 = vunpack.c.h.b16 %v1645
    %v1959 = vunpack.c.l.b16 %v1646
    %v1960 = vunpack.c.h.b16 %v1646
    %v1961 = vunpack.c.l.b16 %v1647
    %v1962 = vunpack.c.h.b16 %v1647
    %v1963 = vunpack.c.l.b16 %v1648
    %v1964 = vunpack.c.h.b16 %v1648
    %v1965 = vunpack.c.l.b16 %v1649
    %v1966 = vunpack.c.h.b16 %v1649
    %v1967 = vunpack.c.l.b16 %v1650
    %v1968 = vunpack.c.h.b16 %v1650
    %v1969 = vunpack.c.l.b16 %v1651
    %v1970 = vunpack.c.h.b16 %v1651
    %v1971 = vunpack.c.l.b16 %v1652
    %v1972 = vunpack.c.h.b16 %v1652
    %v1973 = vunpack.c.l.b16 %v1653
    %v1974 = vunpack.c.h.b16 %v1653
    %v1975 = vunpack.c.l.b16 %v1654
    %v1976 = vunpack.c.h.b16 %v1654
    %v1977 = vunpack.c.l.b16 %v1655
    %v1978 = vunpack.c.h.b16 %v1655
    %v1979 = vunpack.c.l.b16 %v1656
    %v1980 = vunpack.c.h.b16 %v1656
    %v1981 = vunpack.c.l.b16 %v1657
    %v1982 = vunpack.c.h.b16 %v1657
    %v1983 = vunpack.c.l.b16 %v1658
    %v1984 = vunpack.c.h.b16 %v1658
    %v1985 = vunpack.c.l.b16 %v1659
    %v1986 = vunpack.c.h.b16 %v1659
    %v1987 = vunpack.c.l.b16 %v1660
    %v1988 = vunpack.c.h.b16 %v1660
    %v1989 = vunpack.c.l.b16 %v1661
    %v1990 = vunpack.c.h.b16 %v1661
    %v1991 = vunpack.c.l.b16 %v1662
    %v1992 = vunpack.c.h.b16 %v1662
    %v1993 = vunpack.c.l.b16 %v1663
    %v1994 = vunpack.c.h.b16 %v1663
    %v1995 = vunpack.c.l.b16 %v1664
    %v1996 = vunpack.c.h.b16 %v1664
    %v1997 = vunpack.c.l.b16 %v1665
    %v1998 = vunpack.c.h.b16 %v1665
    %v1999 = vunpack.c.l.b16 %v1666
    %v2000 = vunpack.c.h.b16 %v1666
    %v2001 = vunpack.c.l.b16 %v1667
    %v2002 = vunpack.c.h.b16 %v1667
    %v2003 = vunpack.c.l.b16 %v1668
    %v2004 = vunpack.c.h.b16 %v1668
    %v2005 = vunpack.c.l.b16 %v1669
    %v2006 = vunpack.c.h.b16 %v1669
    %v2007 = vunpack.c.l.b16 %v1670
    %v2008 = vunpack.c.h.b16 %v1670
    %v2009 = vunpack.c.l.b16 %v1671
    %v2010 = vunpack.c.h.b16 %v1671
    %v2011 = vunpack.c.l.b16 %v1672
    %v2012 = vunpack.c.h.b16 %v1672
    %v2013 = vunpack.c.l.b16 %v1673
    %v2014 = vunpack.c.h.b16 %v1673
    %v2015 = vunpack.c.l.b16 %v1674
    %v2016 = vunpack.c.h.b16 %v1674
    %v2017 = vunpack.c.l.b16 %v1675
    %v2018 = vunpack.c.h.b16 %v1675
    %v2019 = vunpack.c.l.b16 %v1676
    %v2020 = vunpack.c.h.b16 %v1676
    %v2021 = vunpack.c.l.b16 %v1677
    %v2022 = vunpack.c.h.b16 %v1677
    %v2023 = vunpack.c.l.b16 %v1678
    %v2024 = vunpack.c.h.b16 %v1678
    %v2025 = vunpack.c.l.b16 %v1679
    %v2026 = vunpack.c.h.b16 %v1679
    %v2027 = vunpack.c.l.b16 %v1680
    %v2028 = vunpack.c.h.b16 %v1680
    %v2029 = vunpack.c.l.b16 %v1681
    %v2030 = vunpack.c.h.b16 %v1681
    %v2031 = vunpack.c.l.b16 %v1682
    %v2032 = vunpack.c.h.b16 %v1682
    %v2033 = vunpack.c.l.b16 %v1683
    %v2034 = vunpack.c.h.b16 %v1683
    %v2035 = vunpack.c.l.b16 %v1684
    %v2036 = vunpack.c.h.b16 %v1684
    %v2037 = vunpack.c.l.b16 %v1685
    %v2038 = vunpack.c.h.b16 %v1685
    %v2039 = vunpack.c.l.b16 %v1686
    %v2040 = vunpack.c.h.b16 %v1686
    %v2041 = vunpack.c.l.b16 %v1687
    %v2042 = vunpack.c.h.b16 %v1687
    %v2043 = vunpack.c.l.b16 %v1688
    %v2044 = vunpack.c.h.b16 %v1688
    %v2045 = vunpack.c.l.b16 %v1689
    %v2046 = vunpack.c.h.b16 %v1689
    %v2047 = vunpack.c.l.b16 %v1690
    %v2048 = vunpack.c.h.b16 %v1690
    %v2049 = vunpack.c.l.b16 %v1691
    %v2050 = vunpack.c.h.b16 %v1691
    %v2051 = vunpack.c.l.b16 %v1692
    %v2052 = vunpack.c.h.b16 %v1692
    %v2053 = vunpack.c.l.b16 %v1693
    %v2054 = vunpack.c.h.b16 %v1693
    %v2055 = vunpack.c.l.b16 %v1694
    %v2056 = vunpack.c.h.b16 %v1694
    %v2057 = vunpack.c.l.b16 %v1695
    %v2058 = vunpack.c.h.b16 %v1695
    %v2059 = vunpack.c.l.b16 %v1696
    %v2060 = vunpack.c.h.b16 %v1696
    %v2061 = vunpack.c.l.b16 %v1697
    %v2062 = vunpack.c.h.b16 %v1697
    %v2063 = vunpack.c.l.b16 %v1698
    %v2064 = vunpack.c.h.b16 %v1698
    %v2065 = vunpack.c.l.b16 %v1699
    %v2066 = vunpack.c.h.b16 %v1699
    %v2067 = vunpack.c.l.b16 %v1700
    %v2068 = vunpack.c.h.b16 %v1700
    %v2069 = vunpack.c.l.b16 %v1701
    %v2070 = vunpack.c.h.b16 %v1701
    %v2071 = vunpack.c.l.b16 %v1702
    %v2072 = vunpack.c.h.b16 %v1702
    %v2073 = vunpack.c.l.b16 %v1703
    %v2074 = vunpack.c.h.b16 %v1703
    %v2075 = vunpack.c.l.b16 %v1704
    %v2076 = vunpack.c.h.b16 %v1704
    %v2077 = vunpack.c.l.b16 %v1705
    %v2078 = vunpack.c.h.b16 %v1705
    %v2079 = vunpack.c.l.b16 %v1706
    %v2080 = vunpack.c.h.b16 %v1706
    %v2081 = vunpack.c.l.b16 %v1707
    %v2082 = vunpack.c.h.b16 %v1707
    %v2083 = vunpack.c.l.b16 %v1708
    %v2084 = vunpack.c.h.b16 %v1708
    %v2085 = vunpack.c.l.b16 %v1709
    %v2086 = vunpack.c.h.b16 %v1709
    %v2087 = vunpack.c.l.b16 %v1710
    %v2088 = vunpack.c.h.b16 %v1710
    %v2089 = vunpack.c.l.b16 %v1711
    %v2090 = vunpack.c.h.b16 %v1711
    %v2091 = vunpack.c.l.b16 %v1712
    %v2092 = vunpack.c.h.b16 %v1712
    %v2093 = vunpack.c.l.b16 %v1713
    %v2094 = vunpack.c.h.b16 %v1713
    %v2095 = vunpack.c.l.b16 %v1714
    %v2096 = vunpack.c.h.b16 %v1714
    %v2097 = vunpack.c.l.b16 %v1715
    %v2098 = vunpack.c.h.b16 %v1715
    %v2099 = vunpack.c.l.b16 %v1716
    %v2100 = vunpack.c.h.b16 %v1716
    %v2101 = vunpack.c.l.b16 %v1717
    %v2102 = vunpack.c.h.b16 %v1717
    %v2103 = vunpack.c.l.b16 %v1718
    %v2104 = vunpack.c.h.b16 %v1718
    %v2105 = vunpack.c.l.b16 %v1719
    %v2106 = vunpack.c.h.b16 %v1719
    %v2107 = vunpack.c.l.b16 %v1720
    %v2108 = vunpack.c.h.b16 %v1720
    %v2109 = vunpack.c.l.b16 %v1721
    %v2110 = vunpack.c.h.b16 %v1721
    %v2111 = vunpack.c.l.b16 %v1722
    %v2112 = vunpack.c.h.b16 %v1722
    %v2113 = vunpack.c.l.b16 %v1723
    %v2114 = vunpack.c.h.b16 %v1723
    %v2115 = vunpack.c.l.b16 %v1724
    %v2116 = vunpack.c.h.b16 %v1724
    %v2117 = vunpack.c.l.b16 %v1725
    %v2118 = vunpack.c.h.b16 %v1725
    %v2119 = vpack.c.b16 %v1867, %v1863
    %v2120 = vpack.c.b16 %v1868, %v1864
    %v2121 = vpack.c.b16 %v1869, %v1865
    %v2122 = vpack.c.b16 %v1870, %v1866
    %v2123 = vpack.c.b16 %v1875, %v1871
    %v2124 = vpack.c.b16 %v1876, %v1872
    %v2125 = vpack.c.b16 %v1877, %v1873
    %v2126 = vpack.c.b16 %v1878, %v1874
    %v2127 = vpack.c.b16 %v1883, %v1879
    %v2128 = vpack.c.b16 %v1884, %v1880
    %v2129 = vpack.c.b16 %v1885, %v1881
    %v2130 = vpack.c.b16 %v1886, %v1882
    %v2131 = vpack.c.b16 %v1891, %v1887
    %v2132 = vpack.c.b16 %v1892, %v1888
    %v2133 = vpack.c.b16 %v1893, %v1889
    %v2134 = vpack.c.b16 %v1894, %v1890
    %v2135 = vpack.c.b16 %v1899, %v1895
    %v2136 = vpack.c.b16 %v1900, %v1896
    %v2137 = vpack.c.b16 %v1901, %v1897
    %v2138 = vpack.c.b16 %v1902, %v1898
    %v2139 = vpack.c.b16 %v1907, %v1903
    %v2140 = vpack.c.b16 %v1908, %v1904
    %v2141 = vpack.c.b16 %v1909, %v1905
    %v2142 = vpack.c.b16 %v1910, %v1906
    %v2143 = vpack.c.b16 %v1915, %v1911
    %v2144 = vpack.c.b16 %v1916, %v1912
    %v2145 = vpack.c.b16 %v1917, %v1913
    %v2146 = vpack.c.b16 %v1918, %v1914
    %v2147 = vpack.c.b16 %v1923, %v1919
    %v2148 = vpack.c.b16 %v1924, %v1920
    %v2149 = vpack.c.b16 %v1925, %v1921
    %v2150 = vpack.c.b16 %v1926, %v1922
    %v2151 = vpack.c.b16 %v1931, %v1927
    %v2152 = vpack.c.b16 %v1932, %v1928
    %v2153 = vpack.c.b16 %v1933, %v1929
    %v2154 = vpack.c.b16 %v1934, %v1930
    %v2155 = vpack.c.b16 %v1939, %v1935
    %v2156 = vpack.c.b16 %v1940, %v1936
    %v2157 = vpack.c.b16 %v1941, %v1937
    %v2158 = vpack.c.b16 %v1942, %v1938
    %v2159 = vpack.c.b16 %v1947, %v1943
    %v2160 = vpack.c.b16 %v1948, %v1944
    %v2161 = vpack.c.b16 %v1949, %v1945
    %v2162 = vpack.c.b16 %v1950, %v1946
    %v2163 = vpack.c.b16 %v1955, %v1951
    %v2164 = vpack.c.b16 %v1956, %v1952
    %v2165 = vpack.c.b16 %v1957, %v1953
    %v2166 = vpack.c.b16 %v1958, %v1954
    %v2167 = vpack.c.b16 %v1963, %v1959
    %v2168 = vpack.c.b16 %v1964, %v1960
    %v2169 = vpack.c.b16 %v1965, %v1961
    %v2170 = vpack.c.b16 %v1966, %v1962
    %v2171 = vpack.c.b16 %v1971, %v1967
    %v2172 = vpack.c.b16 %v1972, %v1968
    %v2173 = vpack.c.b16 %v1973, %v1969
    %v2174 = vpack.c.b16 %v1974, %v1970
    %v2175 = vpack.c.b16 %v1979, %v1975
    %v2176 = vpack.c.b16 %v1980, %v1976
    %v2177 = vpack.c.b16 %v1981, %v1977
    %v2178 = vpack.c.b16 %v1982, %v1978
    %v2179 = vpack.c.b16 %v1987, %v1983
    %v2180 = vpack.c.b16 %v1988, %v1984
    %v2181 = vpack.c.b16 %v1989, %v1985
    %v2182 = vpack.c.b16 %v1990, %v1986
    %v2183 = vpack.c.b16 %v1995, %v1991
    %v2184 = vpack.c.b16 %v1996, %v1992
    %v2185 = vpack.c.b16 %v1997, %v1993
    %v2186 = vpack.c.b16 %v1998, %v1994
    %v2187 = vpack.c.b16 %v2003, %v1999
    %v2188 = vpack.c.b16 %v2004, %v2000
    %v2189 = vpack.c.b16 %v2005, %v2001
    %v2190 = vpack.c.b16 %v2006, %v2002
    %v2191 = vpack.c.b16 %v2011, %v2007
    %v2192 = vpack.c.b16 %v2012, %v2008
    %v2193 = vpack.c.b16 %v2013, %v2009
    %v2194 = vpack.c.b16 %v2014, %v2010
    %v2195 = vpack.c.b16 %v2019, %v2015
    %v2196 = vpack.c.b16 %v2020, %v2016
    %v2197 = vpack.c.b16 %v2021, %v2017
    %v2198 = vpack.c.b16 %v2022, %v2018
    %v2199 = vpack.c.b16 %v2027, %v2023
    %v2200 = vpack.c.b16 %v2028, %v2024
    %v2201 = vpack.c.b16 %v2029, %v2025
    %v2202 = vpack.c.b16 %v2030, %v2026
    %v2203 = vpack.c.b16 %v2035, %v2031
    %v2204 = vpack.c.b16 %v2036, %v2032
    %v2205 = vpack.c.b16 %v2037, %v2033
    %v2206 = vpack.c.b16 %v2038, %v2034
    %v2207 = vpack.c.b16 %v2043, %v2039
    %v2208 = vpack.c.b16 %v2044, %v2040
    %v2209 = vpack.c.b16 %v2045, %v2041
    %v2210 = vpack.c.b16 %v2046, %v2042
    %v2211 = vpack.c.b16 %v2051, %v2047
    %v2212 = vpack.c.b16 %v2052, %v2048
    %v2213 = vpack.c.b16 %v2053, %v2049
    %v2214 = vpack.c.b16 %v2054, %v2050
    %v2215 = vpack.c.b16 %v2059, %v2055
    %v2216 = vpack.c.b16 %v2060, %v2056
    %v2217 = vpack.c.b16 %v2061, %v2057
    %v2218 = vpack.c.b16 %v2062, %v2058
    %v2219 = vpack.c.b16 %v2067, %v2063
    %v2220 = vpack.c.b16 %v2068, %v2064
    %v2221 = vpack.c.b16 %v2069, %v2065
    %v2222 = vpack.c.b16 %v2070, %v2066
    %v2223 = vpack.c.b16 %v2075, %v2071
    %v2224 = vpack.c.b16 %v2076, %v2072
    %v2225 = vpack.c.b16 %v2077, %v2073
    %v2226 = vpack.c.b16 %v2078, %v2074
    %v2227 = vpack.c.b16 %v2083, %v2079
    %v2228 = vpack.c.b16 %v2084, %v2080
    %v2229 = vpack.c.b16 %v2085, %v2081
    %v2230 = vpack.c.b16 %v2086, %v2082
    %v2231 = vpack.c.b16 %v2091, %v2087
    %v2232 = vpack.c.b16 %v2092, %v2088
    %v2233 = vpack.c.b16 %v2093, %v2089
    %v2234 = vpack.c.b16 %v2094, %v2090
    %v2235 = vpack.c.b16 %v2099, %v2095
    %v2236 = vpack.c.b16 %v2100, %v2096
    %v2237 = vpack.c.b16 %v2101, %v2097
    %v2238 = vpack.c.b16 %v2102, %v2098
    %v2239 = vpack.c.b16 %v2107, %v2103
    %v2240 = vpack.c.b16 %v2108, %v2104
    %v2241 = vpack.c.b16 %v2109, %v2105
    %v2242 = vpack.c.b16 %v2110, %v2106
    %v2243 = vpack.c.b16 %v2115, %v2111
    %v2244 = vpack.c.b16 %v2116, %v2112
    %v2245 = vpack.c.b16 %v2117, %v2113
    %v2246 = vpack.c.b16 %v2118, %v2114
    %2375 = vmatpush.bf16.msra.mxu0 %v2147
    %2376 = vmatpush.bf16.msra.mxu0 %v2143
    %2377 = vmatpush.bf16.msra.mxu0 %v2139
    %2378 = vmatpush.bf16.msra.mxu0 %v2135
    %2379 = vmatpush.bf16.msra.mxu0 %v2131
    %2380 = vmatpush.bf16.msra.mxu0 %v2127
    %2381 = vmatpush.bf16.msra.mxu0 %v2123
    %2382 = vmatpush.bf16.msra.mxu0 %v2119
    %2383 = vmatmul.bf16.gmra.mxu0 %v1594
    %v2384 = vpop.f32.mrf.mxu0
    %v2385 = vadd.f32 %v1727, %v2384
    %v2386 = vpop.f32.mrf.mxu0
    %v2387 = vadd.f32 %v1727, %v2386
    %2388 = vdwg.mxu0
    %2389 = vmatpush.bf16.msra.mxu0 %v2179
    %2390 = vmatpush.bf16.msra.mxu0 %v2175
    %2391 = vmatpush.bf16.msra.mxu0 %v2171
    %2392 = vmatpush.bf16.msra.mxu0 %v2167
    %2393 = vmatpush.bf16.msra.mxu0 %v2163
    %2394 = vmatpush.bf16.msra.mxu0 %v2159
    %2395 = vmatpush.bf16.msra.mxu0 %v2155
    %2396 = vmatpush.bf16.msra.mxu0 %v2151
    %2397 = vmatmul.bf16.gmra.mxu0 %v1595
    %v2398 = vpop.f32.mrf.mxu0
    %v2399 = vadd.f32 %v2385, %v2398
    %v2400 = vpop.f32.mrf.mxu0
    %v2401 = vadd.f32 %v2387, %v2400
    %2402 = vdwg.mxu0
    %2403 = vmatpush.bf16.msra.mxu0 %v2211
    %2404 = vmatpush.bf16.msra.mxu0 %v2207
    %2405 = vmatpush.bf16.msra.mxu0 %v2203
    %2406 = vmatpush.bf16.msra.mxu0 %v2199
    %2407 = vmatpush.bf16.msra.mxu0 %v2195
    %2408 = vmatpush.bf16.msra.mxu0 %v2191
    %2409 = vmatpush.bf16.msra.mxu0 %v2187
    %2410 = vmatpush.bf16.msra.mxu0 %v2183
    %2411 = vmatmul.bf16.gmra.mxu0 %v1596
    %v2412 = vpop.f32.mrf.mxu0
    %v2413 = vadd.f32 %v2399, %v2412
    %v2414 = vpop.f32.mrf.mxu0
    %v2415 = vadd.f32 %v2401, %v2414
    %2416 = vdwg.mxu0
    %2417 = vmatpush.bf16.msra.mxu0 %v2243
    %2418 = vmatpush.bf16.msra.mxu0 %v2239
    %2419 = vmatpush.bf16.msra.mxu0 %v2235
    %2420 = vmatpush.bf16.msra.mxu0 %v2231
    %2421 = vmatpush.bf16.msra.mxu0 %v2227
    %2422 = vmatpush.bf16.msra.mxu0 %v2223
    %2423 = vmatpush.bf16.msra.mxu0 %v2219
    %2424 = vmatpush.bf16.msra.mxu0 %v2215
    %2425 = vmatmul.bf16.gmra.mxu0 %v1597
    %v2426 = vpop.f32.mrf.mxu0
    %v2427 = vadd.f32 %v2413, %v2426
    %v2428 = vpop.f32.mrf.mxu0
    %v2429 = vadd.f32 %v2415, %v2428
    %2430 = vdwg.mxu0
    %2431 = vmatpush.bf16.msra.mxu0 %v2148
    %2432 = vmatpush.bf16.msra.mxu0 %v2144
    %2433 = vmatpush.bf16.msra.mxu0 %v2140
    %2434 = vmatpush.bf16.msra.mxu0 %v2136
    %2435 = vmatpush.bf16.msra.mxu0 %v2132
    %2436 = vmatpush.bf16.msra.mxu0 %v2128
    %2437 = vmatpush.bf16.msra.mxu0 %v2124
    %2438 = vmatpush.bf16.msra.mxu0 %v2120
    %2439 = vmatmul.bf16.gmra.mxu0 %v1594
    %v2440 = vpop.f32.mrf.mxu0
    %v2441 = vadd.f32 %v1728, %v2440
    %v2442 = vpop.f32.mrf.mxu0
    %v2443 = vadd.f32 %v1728, %v2442
    %2444 = vdwg.mxu0
    %2445 = vmatpush.bf16.msra.mxu0 %v2180
    %2446 = vmatpush.bf16.msra.mxu0 %v2176
    %2447 = vmatpush.bf16.msra.mxu0 %v2172
    %2448 = vmatpush.bf16.msra.mxu0 %v2168
    %2449 = vmatpush.bf16.msra.mxu0 %v2164
    %2450 = vmatpush.bf16.msra.mxu0 %v2160
    %2451 = vmatpush.bf16.msra.mxu0 %v2156
    %2452 = vmatpush.bf16.msra.mxu0 %v2152
    %2453 = vmatmul.bf16.gmra.mxu0 %v1595
    %v2454 = vpop.f32.mrf.mxu0
    %v2455 = vadd.f32 %v2441, %v2454
    %v2456 = vpop.f32.mrf.mxu0
    %v2457 = vadd.f32 %v2443, %v2456
    %2458 = vdwg.mxu0
    %2459 = vmatpush.bf16.msra.mxu0 %v2212
    %2460 = vmatpush.bf16.msra.mxu0 %v2208
    %2461 = vmatpush.bf16.msra.mxu0 %v2204
    %2462 = vmatpush.bf16.msra.mxu0 %v2200
    %2463 = vmatpush.bf16.msra.mxu0 %v2196
    %2464 = vmatpush.bf16.msra.mxu0 %v2192
    %2465 = vmatpush.bf16.msra.mxu0 %v2188
    %2466 = vmatpush.bf16.msra.mxu0 %v2184
    %2467 = vmatmul.bf16.gmra.mxu0 %v1596
    %v2468 = vpop.f32.mrf.mxu0
    %v2469 = vadd.f32 %v2455, %v2468
    %v2470 = vpop.f32.mrf.mxu0
    %v2471 = vadd.f32 %v2457, %v2470
    %2472 = vdwg.mxu0
    %2473 = vmatpush.bf16.msra.mxu0 %v2244
    %2474 = vmatpush.bf16.msra.mxu0 %v2240
    %2475 = vmatpush.bf16.msra.mxu0 %v2236
    %2476 = vmatpush.bf16.msra.mxu0 %v2232
    %2477 = vmatpush.bf16.msra.mxu0 %v2228
    %2478 = vmatpush.bf16.msra.mxu0 %v2224
    %2479 = vmatpush.bf16.msra.mxu0 %v2220
    %2480 = vmatpush.bf16.msra.mxu0 %v2216
    %2481 = vmatmul.bf16.gmra.mxu0 %v1597
    %v2482 = vpop.f32.mrf.mxu0
    %v2483 = vadd.f32 %v2469, %v2482
    %v2484 = vpop.f32.mrf.mxu0
    %v2485 = vadd.f32 %v2471, %v2484
    %2486 = vdwg.mxu0
    %2487 = vmatpush.bf16.msra.mxu0 %v2149
    %2488 = vmatpush.bf16.msra.mxu0 %v2145
    %2489 = vmatpush.bf16.msra.mxu0 %v2141
    %2490 = vmatpush.bf16.msra.mxu0 %v2137
    %2491 = vmatpush.bf16.msra.mxu0 %v2133
    %2492 = vmatpush.bf16.msra.mxu0 %v2129
    %2493 = vmatpush.bf16.msra.mxu0 %v2125
    %2494 = vmatpush.bf16.msra.mxu0 %v2121
    %2495 = vmatmul.bf16.gmra.mxu0 %v1594
    %v2496 = vpop.f32.mrf.mxu0
    %v2497 = vadd.f32 %v1729, %v2496
    %v2498 = vpop.f32.mrf.mxu0
    %v2499 = vadd.f32 %v1729, %v2498
    %2500 = vdwg.mxu0
    %2501 = vmatpush.bf16.msra.mxu0 %v2181
    %2502 = vmatpush.bf16.msra.mxu0 %v2177
    %2503 = vmatpush.bf16.msra.mxu0 %v2173
    %2504 = vmatpush.bf16.msra.mxu0 %v2169
    %2505 = vmatpush.bf16.msra.mxu0 %v2165
    %2506 = vmatpush.bf16.msra.mxu0 %v2161
    %2507 = vmatpush.bf16.msra.mxu0 %v2157
    %2508 = vmatpush.bf16.msra.mxu0 %v2153
    %2509 = vmatmul.bf16.gmra.mxu0 %v1595
    %v2510 = vpop.f32.mrf.mxu0
    %v2511 = vadd.f32 %v2497, %v2510
    %v2512 = vpop.f32.mrf.mxu0
    %v2513 = vadd.f32 %v2499, %v2512
    %2514 = vdwg.mxu0
    %2515 = vmatpush.bf16.msra.mxu0 %v2213
    %2516 = vmatpush.bf16.msra.mxu0 %v2209
    %2517 = vmatpush.bf16.msra.mxu0 %v2205
    %2518 = vmatpush.bf16.msra.mxu0 %v2201
    %2519 = vmatpush.bf16.msra.mxu0 %v2197
    %2520 = vmatpush.bf16.msra.mxu0 %v2193
    %2521 = vmatpush.bf16.msra.mxu0 %v2189
    %2522 = vmatpush.bf16.msra.mxu0 %v2185
    %2523 = vmatmul.bf16.gmra.mxu0 %v1596
    %v2524 = vpop.f32.mrf.mxu0
    %v2525 = vadd.f32 %v2511, %v2524
    %v2526 = vpop.f32.mrf.mxu0
    %v2527 = vadd.f32 %v2513, %v2526
    %2528 = vdwg.mxu0
    %2529 = vmatpush.bf16.msra.mxu0 %v2245
    %2530 = vmatpush.bf16.msra.mxu0 %v2241
    %2531 = vmatpush.bf16.msra.mxu0 %v2237
    %2532 = vmatpush.bf16.msra.mxu0 %v2233
    %2533 = vmatpush.bf16.msra.mxu0 %v2229
    %2534 = vmatpush.bf16.msra.mxu0 %v2225
    %2535 = vmatpush.bf16.msra.mxu0 %v2221
    %2536 = vmatpush.bf16.msra.mxu0 %v2217
    %2537 = vmatmul.bf16.gmra.mxu0 %v1597
    %v2538 = vpop.f32.mrf.mxu0
    %v2539 = vadd.f32 %v2525, %v2538
    %v2540 = vpop.f32.mrf.mxu0
    %v2541 = vadd.f32 %v2527, %v2540
    %2542 = vdwg.mxu0
    %2543 = vmatpush.bf16.msra.mxu0 %v2150
    %2544 = vmatpush.bf16.msra.mxu0 %v2146
    %2545 = vmatpush.bf16.msra.mxu0 %v2142
    %2546 = vmatpush.bf16.msra.mxu0 %v2138
    %2547 = vmatpush.bf16.msra.mxu0 %v2134
    %2548 = vmatpush.bf16.msra.mxu0 %v2130
    %2549 = vmatpush.bf16.msra.mxu0 %v2126
    %2550 = vmatpush.bf16.msra.mxu0 %v2122
    %2551 = vmatmul.bf16.gmra.mxu0 %v1594
    %v2552 = vpop.f32.mrf.mxu0
    %v2553 = vadd.f32 %v1730, %v2552
    %v2554 = vpop.f32.mrf.mxu0
    %v2555 = vadd.f32 %v1730, %v2554
    %2556 = vdwg.mxu0
    %2557 = vmatpush.bf16.msra.mxu0 %v2182
    %2558 = vmatpush.bf16.msra.mxu0 %v2178
    %2559 = vmatpush.bf16.msra.mxu0 %v2174
    %2560 = vmatpush.bf16.msra.mxu0 %v2170
    %2561 = vmatpush.bf16.msra.mxu0 %v2166
    %2562 = vmatpush.bf16.msra.mxu0 %v2162
    %2563 = vmatpush.bf16.msra.mxu0 %v2158
    %2564 = vmatpush.bf16.msra.mxu0 %v2154
    %2565 = vmatmul.bf16.gmra.mxu0 %v1595
    %v2566 = vpop.f32.mrf.mxu0
    %v2567 = vadd.f32 %v2553, %v2566
    %v2568 = vpop.f32.mrf.mxu0
    %v2569 = vadd.f32 %v2555, %v2568
    %2570 = vdwg.mxu0
    %2571 = vmatpush.bf16.msra.mxu0 %v2214
    %2572 = vmatpush.bf16.msra.mxu0 %v2210
    %2573 = vmatpush.bf16.msra.mxu0 %v2206
    %2574 = vmatpush.bf16.msra.mxu0 %v2202
    %2575 = vmatpush.bf16.msra.mxu0 %v2198
    %2576 = vmatpush.bf16.msra.mxu0 %v2194
    %2577 = vmatpush.bf16.msra.mxu0 %v2190
    %2578 = vmatpush.bf16.msra.mxu0 %v2186
    %2579 = vmatmul.bf16.gmra.mxu0 %v1596
    %v2580 = vpop.f32.mrf.mxu0
    %v2581 = vadd.f32 %v2567, %v2580
    %v2582 = vpop.f32.mrf.mxu0
    %v2583 = vadd.f32 %v2569, %v2582
    %2584 = vdwg.mxu0
    %2585 = vmatpush.bf16.msra.mxu0 %v2246
    %2586 = vmatpush.bf16.msra.mxu0 %v2242
    %2587 = vmatpush.bf16.msra.mxu0 %v2238
    %2588 = vmatpush.bf16.msra.mxu0 %v2234
    %2589 = vmatpush.bf16.msra.mxu0 %v2230
    %2590 = vmatpush.bf16.msra.mxu0 %v2226
    %2591 = vmatpush.bf16.msra.mxu0 %v2222
    %2592 = vmatpush.bf16.msra.mxu0 %v2218
    %2593 = vmatmul.bf16.gmra.mxu0 %v1597
    %v2594 = vpop.f32.mrf.mxu0
    %v2595 = vadd.f32 %v2581, %v2594
    %v2596 = vpop.f32.mrf.mxu0
    %v2597 = vadd.f32 %v2583, %v2596
    %2598 = vdwg.mxu0
    %v2599 = vmax.f32 %v2427, 0.0
    %v2600 = vmax.f32 %v2483, 0.0
    %v2601 = vmax.f32 %v2539, 0.0
    %v2602 = vmax.f32 %v2595, 0.0
    %v2603 = vmax.f32 %v2429, 0.0
    %v2604 = vmax.f32 %v2485, 0.0
    %v2605 = vmax.f32 %v2541, 0.0
    %v2606 = vmax.f32 %v2597, 0.0
    %v2607 = vpack.c.bf16 %v2603, %v2599
    %v2608 = vpack.c.bf16 %v2604, %v2600
    %v2609 = vpack.c.bf16 %v2605, %v2601
    %v2610 = vpack.c.bf16 %v2606, %v2602
    %v2611 = vld [vmem:[#allocation6] sm:$0xf]
    %v2612 = vld [vmem:[#allocation6 + $0x4] sm:$0xf]
    %v2613 = vld [vmem:[#allocation6 + $0x8] sm:$0xf]
    %v2614 = vld [vmem:[#allocation6 + $0xc] sm:$0xf]
    %v2615 = vld [vmem:[#allocation6 + $0x10] sm:$0xf]
    %v2616 = vld [vmem:[#allocation6 + $0x14] sm:$0xf]
    %v2617 = vld [vmem:[#allocation6 + $0x18] sm:$0xf]
    %v2618 = vld [vmem:[#allocation6 + $0x1c] sm:$0xf]
    %v2619 = vld [vmem:[#allocation6 + $0x20] sm:$0xf]
    %v2620 = vld [vmem:[#allocation6 + $0x24] sm:$0xf]
    %v2621 = vld [vmem:[#allocation6 + $0x28] sm:$0xf]
    %v2622 = vld [vmem:[#allocation6 + $0x2c] sm:$0xf]
    %v2623 = vld [vmem:[#allocation6 + $0x30] sm:$0xf]
    %v2624 = vld [vmem:[#allocation6 + $0x34] sm:$0xf]
    %v2625 = vld [vmem:[#allocation6 + $0x38] sm:$0xf]
    %v2626 = vld [vmem:[#allocation6 + $0x3c] sm:$0xf]
    %v2627 = vld [vmem:[#allocation6 + $0x40] sm:$0xf]
    %v2628 = vld [vmem:[#allocation6 + $0x44] sm:$0xf]
    %v2629 = vld [vmem:[#allocation6 + $0x48] sm:$0xf]
    %v2630 = vld [vmem:[#allocation6 + $0x4c] sm:$0xf]
    %v2631 = vld [vmem:[#allocation6 + $0x50] sm:$0xf]
    %v2632 = vld [vmem:[#allocation6 + $0x54] sm:$0xf]
    %v2633 = vld [vmem:[#allocation6 + $0x58] sm:$0xf]
    %v2634 = vld [vmem:[#allocation6 + $0x5c] sm:$0xf]
    %v2635 = vld [vmem:[#allocation6 + $0x60] sm:$0xf]
    %v2636 = vld [vmem:[#allocation6 + $0x64] sm:$0xf]
    %v2637 = vld [vmem:[#allocation6 + $0x68] sm:$0xf]
    %v2638 = vld [vmem:[#allocation6 + $0x6c] sm:$0xf]
    %v2639 = vld [vmem:[#allocation6 + $0x70] sm:$0xf]
    %v2640 = vld [vmem:[#allocation6 + $0x74] sm:$0xf]
    %v2641 = vld [vmem:[#allocation6 + $0x78] sm:$0xf]
    %v2642 = vld [vmem:[#allocation6 + $0x7c] sm:$0xf]
    %v2643 = vld [vmem:[#allocation6 + $0x80] sm:$0xf]
    %v2644 = vld [vmem:[#allocation6 + $0x84] sm:$0xf]
    %v2645 = vld [vmem:[#allocation6 + $0x88] sm:$0xf]
    %v2646 = vld [vmem:[#allocation6 + $0x8c] sm:$0xf]
    %v2647 = vld [vmem:[#allocation6 + $0x90] sm:$0xf]
    %v2648 = vld [vmem:[#allocation6 + $0x94] sm:$0xf]
    %v2649 = vld [vmem:[#allocation6 + $0x98] sm:$0xf]
    %v2650 = vld [vmem:[#allocation6 + $0x9c] sm:$0xf]
    %v2651 = vld [vmem:[#allocation6 + $0xa0] sm:$0xf]
    %v2652 = vld [vmem:[#allocation6 + $0xa4] sm:$0xf]
    %v2653 = vld [vmem:[#allocation6 + $0xa8] sm:$0xf]
    %v2654 = vld [vmem:[#allocation6 + $0xac] sm:$0xf]
    %v2655 = vld [vmem:[#allocation6 + $0xb0] sm:$0xf]
    %v2656 = vld [vmem:[#allocation6 + $0xb4] sm:$0xf]
    %v2657 = vld [vmem:[#allocation6 + $0xb8] sm:$0xf]
    %v2658 = vld [vmem:[#allocation6 + $0xbc] sm:$0xf]
    %v2659 = vld [vmem:[#allocation6 + $0xc0] sm:$0xf]
    %v2660 = vld [vmem:[#allocation6 + $0xc4] sm:$0xf]
    %v2661 = vld [vmem:[#allocation6 + $0xc8] sm:$0xf]
    %v2662 = vld [vmem:[#allocation6 + $0xcc] sm:$0xf]
    %v2663 = vld [vmem:[#allocation6 + $0xd0] sm:$0xf]
    %v2664 = vld [vmem:[#allocation6 + $0xd4] sm:$0xf]
    %v2665 = vld [vmem:[#allocation6 + $0xd8] sm:$0xf]
    %v2666 = vld [vmem:[#allocation6 + $0xdc] sm:$0xf]
    %v2667 = vld [vmem:[#allocation6 + $0xe0] sm:$0xf]
    %v2668 = vld [vmem:[#allocation6 + $0xe4] sm:$0xf]
    %v2669 = vld [vmem:[#allocation6 + $0xe8] sm:$0xf]
    %v2670 = vld [vmem:[#allocation6 + $0xec] sm:$0xf]
    %v2671 = vld [vmem:[#allocation6 + $0xf0] sm:$0xf]
    %v2672 = vld [vmem:[#allocation6 + $0xf4] sm:$0xf]
    %v2673 = vld [vmem:[#allocation6 + $0xf8] sm:$0xf]
    %v2674 = vld [vmem:[#allocation6 + $0xfc] sm:$0xf]
    %v2675 = vperm.slane %v88, 0
    %v2740 = vunpack.c.l.b16 %v2611
    %v2741 = vunpack.c.l.b16 %v2612
    %v2742 = vunpack.c.l.b16 %v2613
    %v2743 = vunpack.c.l.b16 %v2614
    %v2744 = vunpack.c.l.b16 %v2615
    %v2745 = vunpack.c.l.b16 %v2616
    %v2746 = vunpack.c.l.b16 %v2617
    %v2747 = vunpack.c.l.b16 %v2618
    %v2748 = vunpack.c.l.b16 %v2619
    %v2749 = vunpack.c.l.b16 %v2620
    %v2750 = vunpack.c.l.b16 %v2621
    %v2751 = vunpack.c.l.b16 %v2622
    %v2752 = vunpack.c.l.b16 %v2623
    %v2753 = vunpack.c.l.b16 %v2624
    %v2754 = vunpack.c.l.b16 %v2625
    %v2755 = vunpack.c.l.b16 %v2626
    %v2756 = vunpack.c.l.b16 %v2627
    %v2757 = vunpack.c.l.b16 %v2628
    %v2758 = vunpack.c.l.b16 %v2629
    %v2759 = vunpack.c.l.b16 %v2630
    %v2760 = vunpack.c.l.b16 %v2631
    %v2761 = vunpack.c.l.b16 %v2632
    %v2762 = vunpack.c.l.b16 %v2633
    %v2763 = vunpack.c.l.b16 %v2634
    %v2764 = vunpack.c.l.b16 %v2635
    %v2765 = vunpack.c.l.b16 %v2636
    %v2766 = vunpack.c.l.b16 %v2637
    %v2767 = vunpack.c.l.b16 %v2638
    %v2768 = vunpack.c.l.b16 %v2639
    %v2769 = vunpack.c.l.b16 %v2640
    %v2770 = vunpack.c.l.b16 %v2641
    %v2771 = vunpack.c.l.b16 %v2642
    %v2772 = vunpack.c.l.b16 %v2643
    %v2773 = vunpack.c.l.b16 %v2644
    %v2774 = vunpack.c.l.b16 %v2645
    %v2775 = vunpack.c.l.b16 %v2646
    %v2776 = vunpack.c.l.b16 %v2647
    %v2777 = vunpack.c.l.b16 %v2648
    %v2778 = vunpack.c.l.b16 %v2649
    %v2779 = vunpack.c.l.b16 %v2650
    %v2780 = vunpack.c.l.b16 %v2651
    %v2781 = vunpack.c.l.b16 %v2652
    %v2782 = vunpack.c.l.b16 %v2653
    %v2783 = vunpack.c.l.b16 %v2654
    %v2784 = vunpack.c.l.b16 %v2655
    %v2785 = vunpack.c.l.b16 %v2656
    %v2786 = vunpack.c.l.b16 %v2657
    %v2787 = vunpack.c.l.b16 %v2658
    %v2788 = vunpack.c.l.b16 %v2659
    %v2789 = vunpack.c.l.b16 %v2660
    %v2790 = vunpack.c.l.b16 %v2661
    %v2791 = vunpack.c.l.b16 %v2662
    %v2792 = vunpack.c.l.b16 %v2663
    %v2793 = vunpack.c.l.b16 %v2664
    %v2794 = vunpack.c.l.b16 %v2665
    %v2795 = vunpack.c.l.b16 %v2666
    %v2796 = vunpack.c.l.b16 %v2667
    %v2797 = vunpack.c.l.b16 %v2668
    %v2798 = vunpack.c.l.b16 %v2669
    %v2799 = vunpack.c.l.b16 %v2670
    %v2800 = vunpack.c.l.b16 %v2671
    %v2801 = vunpack.c.l.b16 %v2672
    %v2802 = vunpack.c.l.b16 %v2673
    %v2803 = vunpack.c.l.b16 %v2674
    %v2804 = vpack.c.b16 %v2741, %v2740
    %v2805 = vpack.c.b16 %v2743, %v2742
    %v2806 = vpack.c.b16 %v2745, %v2744
    %v2807 = vpack.c.b16 %v2747, %v2746
    %v2808 = vpack.c.b16 %v2749, %v2748
    %v2809 = vpack.c.b16 %v2751, %v2750
    %v2810 = vpack.c.b16 %v2753, %v2752
    %v2811 = vpack.c.b16 %v2755, %v2754
    %v2812 = vpack.c.b16 %v2757, %v2756
    %v2813 = vpack.c.b16 %v2759, %v2758
    %v2814 = vpack.c.b16 %v2761, %v2760
    %v2815 = vpack.c.b16 %v2763, %v2762
    %v2816 = vpack.c.b16 %v2765, %v2764
    %v2817 = vpack.c.b16 %v2767, %v2766
    %v2818 = vpack.c.b16 %v2769, %v2768
    %v2819 = vpack.c.b16 %v2771, %v2770
    %v2820 = vpack.c.b16 %v2773, %v2772
    %v2821 = vpack.c.b16 %v2775, %v2774
    %v2822 = vpack.c.b16 %v2777, %v2776
    %v2823 = vpack.c.b16 %v2779, %v2778
    %v2824 = vpack.c.b16 %v2781, %v2780
    %v2825 = vpack.c.b16 %v2783, %v2782
    %v2826 = vpack.c.b16 %v2785, %v2784
    %v2827 = vpack.c.b16 %v2787, %v2786
    %v2828 = vpack.c.b16 %v2789, %v2788
    %v2829 = vpack.c.b16 %v2791, %v2790
    %v2830 = vpack.c.b16 %v2793, %v2792
    %v2831 = vpack.c.b16 %v2795, %v2794
    %v2832 = vpack.c.b16 %v2797, %v2796
    %v2833 = vpack.c.b16 %v2799, %v2798
    %v2834 = vpack.c.b16 %v2801, %v2800
    %v2835 = vpack.c.b16 %v2803, %v2802
    %2868 = vmatpush.bf16.msra.mxu0 %v2811
    %2869 = vmatpush.bf16.msra.mxu0 %v2810
    %2870 = vmatpush.bf16.msra.mxu0 %v2809
    %2871 = vmatpush.bf16.msra.mxu0 %v2808
    %2872 = vmatpush.bf16.msra.mxu0 %v2807
    %2873 = vmatpush.bf16.msra.mxu0 %v2806
    %2874 = vmatpush.bf16.msra.mxu0 %v2805
    %2875 = vmatpush.bf16.msra.mxu0 %v2804
    %2876 = vmatmul.bf16.gmra.mxu0 %v2607
    %v2877 = vpop.f32.mrf.mxu0
    %v2878 = vadd.f32 %v2675, %v2877
    %v2879 = vpop.f32.mrf.mxu0
    %v2880 = vadd.f32 %v2675, %v2879
    %2881 = vdwg.mxu0
    %2882 = vmatpush.bf16.msra.mxu0 %v2819
    %2883 = vmatpush.bf16.msra.mxu0 %v2818
    %2884 = vmatpush.bf16.msra.mxu0 %v2817
    %2885 = vmatpush.bf16.msra.mxu0 %v2816
    %2886 = vmatpush.bf16.msra.mxu0 %v2815
    %2887 = vmatpush.bf16.msra.mxu0 %v2814
    %2888 = vmatpush.bf16.msra.mxu0 %v2813
    %2889 = vmatpush.bf16.msra.mxu0 %v2812
    %2890 = vmatmul.bf16.gmra.mxu0 %v2608
    %v2891 = vpop.f32.mrf.mxu0
    %v2892 = vadd.f32 %v2878, %v2891
    %v2893 = vpop.f32.mrf.mxu0
    %v2894 = vadd.f32 %v2880, %v2893
    %2895 = vdwg.mxu0
    %2896 = vmatpush.bf16.msra.mxu0 %v2827
    %2897 = vmatpush.bf16.msra.mxu0 %v2826
    %2898 = vmatpush.bf16.msra.mxu0 %v2825
    %2899 = vmatpush.bf16.msra.mxu0 %v2824
    %2900 = vmatpush.bf16.msra.mxu0 %v2823
    %2901 = vmatpush.bf16.msra.mxu0 %v2822
    %2902 = vmatpush.bf16.msra.mxu0 %v2821
    %2903 = vmatpush.bf16.msra.mxu0 %v2820
    %2904 = vmatmul.bf16.gmra.mxu0 %v2609
    %v2905 = vpop.f32.mrf.mxu0
    %v2906 = vadd.f32 %v2892, %v2905
    %v2907 = vpop.f32.mrf.mxu0
    %v2908 = vadd.f32 %v2894, %v2907
    %2909 = vdwg.mxu0
    %2910 = vmatpush.bf16.msra.mxu0 %v2835
    %2911 = vmatpush.bf16.msra.mxu0 %v2834
    %2912 = vmatpush.bf16.msra.mxu0 %v2833
    %2913 = vmatpush.bf16.msra.mxu0 %v2832
    %2914 = vmatpush.bf16.msra.mxu0 %v2831
    %2915 = vmatpush.bf16.msra.mxu0 %v2830
    %2916 = vmatpush.bf16.msra.mxu0 %v2829
    %2917 = vmatpush.bf16.msra.mxu0 %v2828
    %2918 = vmatmul.bf16.gmra.mxu0 %v2610
    %v2919 = vpop.f32.mrf.mxu0
    %v2920 = vadd.f32 %v2906, %v2919
    %v2921 = vpop.f32.mrf.mxu0
    %v2922 = vadd.f32 %v2908, %v2921
    %2923 = vdwg.mxu0
    %2924 = vst [vmem:[%s5] sm:$0xff] %v2920
    %2925 = vst [vmem:[%s5 + $0x8] sm:$0xff] %v2922
    // Predicated region
    $region34: #{conv_neural_network_forward.1} parent=1 // pred_check
      _
    $region35: #{conv_neural_network_forward.1} parent=1 // pred_check_branch
      %2927 = sbr.rel (0) target = $region37
    $region36: #{conv_neural_network_forward.1} parent=1 // pred_region
      _
    $region37: #{conv_neural_network_forward.1} parent=1 // pred_fallthru
      _
    // Predicated region
    $region38: #{conv_neural_network_forward.1} parent=1 // pred_check
      _
    $region39: #{conv_neural_network_forward.1} parent=1 // pred_check_branch
      %2929 = sbr.rel (0) target = $region41
    $region40: #{conv_neural_network_forward.1} parent=1 // pred_region
      _
    $region41: #{conv_neural_network_forward.1} parent=1 // pred_fallthru
      _
    %2930 = vsyncpa [#allocation3], 1
    %2931 = vsyncpa [#allocation5], 1

</llo_original>
